<compile_context>
chip_gen: v6e
topology: v6e:2x2x1
jax: 0.10.0
libtpu: 0.0.40
codegen_flags: <defaults>
</compile_context>

<pallas_src>
import functools
import math

import jax
import jax.numpy as jnp
import numpy as np
from jax import lax
from jax.experimental import pallas as pl
from jax.experimental.pallas import tpu as pltpu

LN_EPS = 1e-5


def _layernorm(x, gamma, beta):
    mu = jnp.mean(x, axis=-1, keepdims=True)
    var = jnp.mean((x - mu) ** 2, axis=-1, keepdims=True)
    return (x - mu) * lax.rsqrt(var + LN_EPS) * gamma + beta


def encoder_layer_kernel(
    x_ref, bias_ref,
    ln1_g_ref, ln1_b_ref,
    wq_ref, bq_ref, wk_ref, bk_ref, wv_ref, bv_ref, wo_ref, bo_ref,
    ln2_g_ref, ln2_b_ref,
    w1_ref, b1_ref, w2_ref, b2_ref,
    o_ref,
    *, num_heads, head_dim,
):
    S = x_ref.shape[1]
    H = x_ref.shape[2]

    x = x_ref[0]  # (S, H), float32

    # ---- self_attention_norm (f32 vector math) ----
    y = _layernorm(x, ln1_g_ref[...], ln1_b_ref[...])
    y16 = y.astype(jnp.bfloat16)

    # ---- MultiHeadAttention: QKV projections (bf16 MXU operands, f32 accumulation) ----
    q = jnp.dot(y16, wq_ref[...], preferred_element_type=jnp.float32) + bq_ref[...]
    k = jnp.dot(y16, wk_ref[...], preferred_element_type=jnp.float32) + bk_ref[...]
    v = jnp.dot(y16, wv_ref[...], preferred_element_type=jnp.float32) + bv_ref[...]

    scale = jnp.float32(head_dim ** (-0.5))

    # Batched-head layout: (S, H) -> (num_heads, S, head_dim) once, then two batched
    # contractions (no per-head lane slicing, no concat).
    qh = jnp.swapaxes((q * scale).reshape(S, num_heads, head_dim), 0, 1).astype(jnp.bfloat16)
    kh = jnp.swapaxes(k.reshape(S, num_heads, head_dim), 0, 1).astype(jnp.bfloat16)
    vh = jnp.swapaxes(v.reshape(S, num_heads, head_dim), 0, 1).astype(jnp.bfloat16)

    s = jnp.einsum('hqd,hkd->hqk', qh, kh,
                   preferred_element_type=jnp.float32)          # (nh, S, S) f32
    s = s + bias_ref[0]                                         # (nh, S, S)
    s = s - jnp.max(s, axis=-1, keepdims=True)
    p = jnp.exp(s)
    p = p * pl.reciprocal(jnp.sum(p, axis=-1, keepdims=True), approx=True)

    ctx_h = jnp.einsum('hqk,hkd->hqd', p.astype(jnp.bfloat16), vh,
                       preferred_element_type=jnp.float32)      # (nh, S, d) f32
    ctx = jnp.swapaxes(ctx_h, 0, 1).reshape(S, H).astype(jnp.bfloat16)

    attn_out = jnp.dot(ctx, wo_ref[...], preferred_element_type=jnp.float32) + bo_ref[...]

    # residual (f32)
    x1 = x + attn_out

    # ---- ffn_norm ----
    y2 = _layernorm(x1, ln2_g_ref[...], ln2_b_ref[...])

    # ---- FeedForwardNetwork: Linear -> GELU(exact erf) -> Linear ----
    h1 = jnp.dot(y2.astype(jnp.bfloat16), w1_ref[...],
                 preferred_element_type=jnp.float32) + b1_ref[...]
    g = 0.5 * h1 * (1.0 + lax.erf(h1 * jnp.float32(1.0 / math.sqrt(2.0))))
    h2 = jnp.dot(g.astype(jnp.bfloat16), w2_ref[...],
                 preferred_element_type=jnp.float32) + b2_ref[...]

    # residual
    o_ref[0] = x1 + h2


def encoder_layer(x, attn_bias, params, *, num_heads):
    B, S, H = x.shape
    head_dim = H // num_heads
    F = params["w1"].shape[1]

    bf16 = jnp.bfloat16
    # Weights streamed as bf16 (half HBM traffic & VMEM footprint); biases / LN params f32.
    wq = params["wq"].astype(bf16)
    wk = params["wk"].astype(bf16)
    wv = params["wv"].astype(bf16)
    wo = params["wo"].astype(bf16)
    w1 = params["w1"].astype(bf16)
    w2 = params["w2"].astype(bf16)

    full2d = lambda shape: pl.BlockSpec(shape, lambda b: (0, 0))

    kernel = functools.partial(encoder_layer_kernel,
                               num_heads=num_heads, head_dim=head_dim)

    # ---- explicit VMEM budget (double-buffered blocks) with headroom ----
    f32b, bf16b = 4, 2
    per_step_blocks = 2 * S * H * f32b + num_heads * S * S * f32b       # x, out, bias
    weight_blocks = (4 * H * H + 2 * H * F) * bf16b + (7 * H + F) * f32b
    vmem_needed = 2 * (per_step_blocks + weight_blocks)                 # double buffering
    vmem_limit = int(min(100 * 1024 * 1024,
                         max(32 * 1024 * 1024, 2 * vmem_needed)))

    # ---- advisory cost estimate for the XLA scheduler ----
    flops = int(2 * B * S * (4 * H * H + 2 * H * F)
                + 4 * B * num_heads * S * S * head_dim)
    transcendentals = int(B * num_heads * S * S + B * S * F)
    bytes_accessed = int((2 * B * S * H + B * num_heads * S * S) * f32b
                         + (4 * H * H + 2 * H * F) * bf16b + (7 * H + F) * f32b)

    return pl.pallas_call(
        kernel,
        out_shape=jax.ShapeDtypeStruct((B, S, H), jnp.float32),
        grid_spec=pltpu.PrefetchScalarGridSpec(
            num_scalar_prefetch=0,
            grid=(B,),
            in_specs=[
                pl.BlockSpec((1, S, H), lambda b: (b, 0, 0)),                    # x
                pl.BlockSpec((1, num_heads, S, S), lambda b: (b, 0, 0, 0)),      # attn_bias
                full2d((1, H)), full2d((1, H)),                                  # ln1 gamma/beta
                full2d((H, H)), full2d((1, H)),                                  # Wq, bq
                full2d((H, H)), full2d((1, H)),                                  # Wk, bk
                full2d((H, H)), full2d((1, H)),                                  # Wv, bv
                full2d((H, H)), full2d((1, H)),                                  # Wo, bo
                full2d((1, H)), full2d((1, H)),                                  # ln2 gamma/beta
                full2d((H, F)), full2d((1, F)),                                  # W1, b1
                full2d((F, H)), full2d((1, H)),                                  # W2, b2
            ],
            out_specs=pl.BlockSpec((1, S, H), lambda b: (b, 0, 0)),
        ),
        compiler_params=pltpu.CompilerParams(
            dimension_semantics=("parallel",),
            vmem_limit_bytes=vmem_limit,
        ),
        cost_estimate=pl.CostEstimate(
            flops=flops, transcendentals=transcendentals,
            bytes_accessed=bytes_accessed),
    )(
        x, attn_bias,
        params["ln1_g"], params["ln1_b"],
        wq, params["bq"], wk, params["bk"],
        wv, params["bv"], wo, params["bo"],
        params["ln2_g"], params["ln2_b"],
        w1, params["b1"], w2, params["b2"],
    )


def reference(x, attn_bias, params, *, num_heads):
    """Pure-JAX f32 reference mirroring the PyTorch forward (eval mode)."""
    B, S, H = x.shape
    d = H // num_heads
    y = _layernorm(x, params["ln1_g"], params["ln1_b"])
    q = (y @ params["wq"] + params["bq"]).reshape(B, S, num_heads, d).transpose(0, 2, 1, 3)
    k = (y @ params["wk"] + params["bk"]).reshape(B, S, num_heads, d).transpose(0, 2, 1, 3)
    v = (y @ params["wv"] + params["bv"]).reshape(B, S, num_heads, d).transpose(0, 2, 1, 3)
    s = jnp.einsum("bhqd,bhkd->bhqk", q * d ** (-0.5), k) + attn_bias
    p = jax.nn.softmax(s, axis=-1)
    ctx = jnp.einsum("bhqk,bhkd->bhqd", p, v).transpose(0, 2, 1, 3).reshape(B, S, H)
    attn_out = ctx @ params["wo"] + params["bo"]
    x1 = x + attn_out
    y2 = _layernorm(x1, params["ln2_g"], params["ln2_b"])
    h1 = y2 @ params["w1"] + params["b1"]
    g = 0.5 * h1 * (1.0 + lax.erf(h1 / jnp.sqrt(2.0)))
    return x1 + (g @ params["w2"] + params["b2"])


def make_params(key, hidden, ffn, dtype=jnp.float32):
    keys = jax.random.split(key, 8)
    return {
        "ln1_g": jnp.ones((1, hidden), dtype),
        "ln1_b": jnp.zeros((1, hidden), dtype),
        "ln2_g": jnp.ones((1, hidden), dtype),
        "ln2_b": jnp.zeros((1, hidden), dtype),
        "wq": 0.05 * jax.random.normal(keys[0], (hidden, hidden), dtype),
        "bq": jnp.zeros((1, hidden), dtype),
        "wk": 0.05 * jax.random.normal(keys[1], (hidden, hidden), dtype),
        "bk": jnp.zeros((1, hidden), dtype),
        "wv": 0.05 * jax.random.normal(keys[2], (hidden, hidden), dtype),
        "bv": jnp.zeros((1, hidden), dtype),
        "wo": 0.05 * jax.random.normal(keys[3], (hidden, hidden), dtype),
        "bo": 0.01 * jax.random.normal(keys[4], (1, hidden), dtype),
        "w1": 0.05 * jax.random.normal(keys[5], (hidden, ffn), dtype),
        "b1": 0.01 * jax.random.normal(keys[6], (1, ffn), dtype),
        "w2": 0.05 * jax.random.normal(keys[7], (ffn, hidden), dtype),
        "b2": jnp.zeros((1, hidden), dtype),
    }


if __name__ == "__main__":
    B, S, H, FFN, NH = 2, 8, 32, 64, 4

    key = jax.random.PRNGKey(0)
    kx, kb, kp = jax.random.split(key, 3)

    x = jax.random.normal(kx, (B, S, H), jnp.float32)
    attn_bias = 0.1 * jax.random.normal(kb, (B, NH, S, S), jnp.float32)
    params = make_params(kp, H, FFN)

    out = encoder_layer(x, attn_bias, params, num_heads=NH)
    out = jax.block_until_ready(out)

    ref = reference(x, attn_bias, params, num_heads=NH)
    assert out.shape == (B, S, H)
    # Tolerance relaxed vs. pure-f32: matmuls use bf16 operands (f32 accumulation)
    # and the softmax denominator uses the approx EUP reciprocal.
    assert np.allclose(np.asarray(out), np.asarray(ref), rtol=1e-2, atol=1e-2)

    print("KERNEL_OK")
</pallas_src>

<mosaic_0001>
module attributes {stable_mosaic.version = 11 : i64} {
  func.func @encoder_layer_kernel(%arg0: i32, %arg1: memref<1x8x32xf32, #tpu.memory_space<vmem>>, %arg2: memref<1x4x8x8xf32, #tpu.memory_space<vmem>>, %arg3: memref<1x32xf32, #tpu.memory_space<vmem>>, %arg4: memref<1x32xf32, #tpu.memory_space<vmem>>, %arg5: memref<32x32xbf16, #tpu.memory_space<vmem>>, %arg6: memref<1x32xf32, #tpu.memory_space<vmem>>, %arg7: memref<32x32xbf16, #tpu.memory_space<vmem>>, %arg8: memref<1x32xf32, #tpu.memory_space<vmem>>, %arg9: memref<32x32xbf16, #tpu.memory_space<vmem>>, %arg10: memref<1x32xf32, #tpu.memory_space<vmem>>, %arg11: memref<32x32xbf16, #tpu.memory_space<vmem>>, %arg12: memref<1x32xf32, #tpu.memory_space<vmem>>, %arg13: memref<1x32xf32, #tpu.memory_space<vmem>>, %arg14: memref<1x32xf32, #tpu.memory_space<vmem>>, %arg15: memref<32x64xbf16, #tpu.memory_space<vmem>>, %arg16: memref<1x64xf32, #tpu.memory_space<vmem>>, %arg17: memref<64x32xbf16, #tpu.memory_space<vmem>>, %arg18: memref<1x32xf32, #tpu.memory_space<vmem>>, %arg19: memref<1x8x32xf32, #tpu.memory_space<vmem>>) attributes {dimension_semantics = [#tpu.dimension_semantics<parallel>], iteration_bounds = array<i64: 2>, scalar_prefetch = 0 : i64, scratch_operands = 0 : i64, tpu.core_type = #tpu.core_type<tc>, window_params = [{transform_indices = @transform_0, window_bounds = array<i64: 1, 8, 32>}, {transform_indices = @transform_1, window_bounds = array<i64: 1, 4, 8, 8>}, {pipeline_mode = #tpu.pipeline_mode<synchronous>, transform_indices = @transform_2, window_bounds = array<i64: 1, 32>}, {pipeline_mode = #tpu.pipeline_mode<synchronous>, transform_indices = @transform_3, window_bounds = array<i64: 1, 32>}, {pipeline_mode = #tpu.pipeline_mode<synchronous>, transform_indices = @transform_4, window_bounds = array<i64: 32, 32>}, {pipeline_mode = #tpu.pipeline_mode<synchronous>, transform_indices = @transform_5, window_bounds = array<i64: 1, 32>}, {pipeline_mode = #tpu.pipeline_mode<synchronous>, transform_indices = @transform_6, window_bounds = array<i64: 32, 32>}, {pipeline_mode = #tpu.pipeline_mode<synchronous>, transform_indices = @transform_7, window_bounds = array<i64: 1, 32>}, {pipeline_mode = #tpu.pipeline_mode<synchronous>, transform_indices = @transform_8, window_bounds = array<i64: 32, 32>}, {pipeline_mode = #tpu.pipeline_mode<synchronous>, transform_indices = @transform_9, window_bounds = array<i64: 1, 32>}, {pipeline_mode = #tpu.pipeline_mode<synchronous>, transform_indices = @transform_10, window_bounds = array<i64: 32, 32>}, {pipeline_mode = #tpu.pipeline_mode<synchronous>, transform_indices = @transform_11, window_bounds = array<i64: 1, 32>}, {pipeline_mode = #tpu.pipeline_mode<synchronous>, transform_indices = @transform_12, window_bounds = array<i64: 1, 32>}, {pipeline_mode = #tpu.pipeline_mode<synchronous>, transform_indices = @transform_13, window_bounds = array<i64: 1, 32>}, {pipeline_mode = #tpu.pipeline_mode<synchronous>, transform_indices = @transform_14, window_bounds = array<i64: 32, 64>}, {pipeline_mode = #tpu.pipeline_mode<synchronous>, transform_indices = @transform_15, window_bounds = array<i64: 1, 64>}, {pipeline_mode = #tpu.pipeline_mode<synchronous>, transform_indices = @transform_16, window_bounds = array<i64: 64, 32>}, {pipeline_mode = #tpu.pipeline_mode<synchronous>, transform_indices = @transform_17, window_bounds = array<i64: 1, 32>}, {transform_indices = @transform_18, window_bounds = array<i64: 1, 8, 32>}]} {
    %c0 = arith.constant 0 : index
    %c0_0 = arith.constant 0 : index
    %c0_1 = arith.constant 0 : index
    %0 = vector.load %arg1[%c0, %c0_0, %c0_1] : memref<1x8x32xf32, #tpu.memory_space<vmem>>, vector<1x8x32xf32>
    %1 = vector.shape_cast %0 : vector<1x8x32xf32> to vector<8x32xf32>
    %c0_2 = arith.constant 0 : index
    %c0_3 = arith.constant 0 : index
    %2 = vector.load %arg3[%c0_2, %c0_3] : memref<1x32xf32, #tpu.memory_space<vmem>>, vector<1x32xf32>
    %c0_4 = arith.constant 0 : index
    %c0_5 = arith.constant 0 : index
    %3 = vector.load %arg4[%c0_4, %c0_5] : memref<1x32xf32, #tpu.memory_space<vmem>>, vector<1x32xf32>
    %cst = arith.constant dense<0.000000e+00> : vector<8xf32>
    %4 = vector.multi_reduction <add>, %1, %cst [1] : vector<8x32xf32> to vector<8xf32>
    %5 = vector.shape_cast %4 : vector<8xf32> to vector<8x1xf32>
    %cst_6 = arith.constant 3.200000e+01 : f32
    %6 = vector.broadcast %cst_6 : f32 to vector<8x1xf32>
    %7 = arith.divf %5, %6 : vector<8x1xf32>
    %8 = vector.broadcast %7 : vector<8x1xf32> to vector<8x32xf32>
    %9 = arith.subf %1, %8 : vector<8x32xf32>
    %10 = arith.mulf %9, %9 : vector<8x32xf32>
    %cst_7 = arith.constant dense<0.000000e+00> : vector<8xf32>
    %11 = vector.multi_reduction <add>, %10, %cst_7 [1] : vector<8x32xf32> to vector<8xf32>
    %12 = vector.shape_cast %11 : vector<8xf32> to vector<8x1xf32>
    %cst_8 = arith.constant 3.200000e+01 : f32
    %13 = vector.broadcast %cst_8 : f32 to vector<8x1xf32>
    %14 = arith.divf %12, %13 : vector<8x1xf32>
    %15 = vector.broadcast %7 : vector<8x1xf32> to vector<8x32xf32>
    %16 = arith.subf %1, %15 : vector<8x32xf32>
    %cst_9 = arith.constant 9.99999974E-6 : f32
    %17 = vector.broadcast %cst_9 : f32 to vector<8x1xf32>
    %18 = arith.addf %14, %17 : vector<8x1xf32>
    %19 = math.rsqrt %18 : vector<8x1xf32>
    %20 = vector.broadcast %19 : vector<8x1xf32> to vector<8x32xf32>
    %21 = arith.mulf %16, %20 : vector<8x32xf32>
    %22 = vector.broadcast %2 : vector<1x32xf32> to vector<8x32xf32>
    %23 = arith.mulf %21, %22 : vector<8x32xf32>
    %24 = vector.broadcast %3 : vector<1x32xf32> to vector<8x32xf32>
    %25 = arith.addf %23, %24 : vector<8x32xf32>
    %26 = arith.truncf %25 : vector<8x32xf32> to vector<8x32xbf16>
    %c0_10 = arith.constant 0 : index
    %c0_11 = arith.constant 0 : index
    %27 = vector.load %arg5[%c0_10, %c0_11] : memref<32x32xbf16, #tpu.memory_space<vmem>>, vector<32x32xbf16>
    %cst_12 = arith.constant dense<0.000000e+00> : vector<8x32xf32>
    %28 = tpu.matmul %26, %27, %cst_12 {dimension_numbers = #tpu.dot_dimension_numbers<[1], [0], [0], [1], [0, 0, 1, 1], [], []>} : vector<8x32xbf16>, vector<32x32xbf16>, vector<8x32xf32> -> vector<8x32xf32>
    %c0_13 = arith.constant 0 : index
    %c0_14 = arith.constant 0 : index
    %29 = vector.load %arg6[%c0_13, %c0_14] : memref<1x32xf32, #tpu.memory_space<vmem>>, vector<1x32xf32>
    %30 = vector.broadcast %29 : vector<1x32xf32> to vector<8x32xf32>
    %31 = arith.addf %28, %30 : vector<8x32xf32>
    %c0_15 = arith.constant 0 : index
    %c0_16 = arith.constant 0 : index
    %32 = vector.load %arg7[%c0_15, %c0_16] : memref<32x32xbf16, #tpu.memory_space<vmem>>, vector<32x32xbf16>
    %cst_17 = arith.constant dense<0.000000e+00> : vector<8x32xf32>
    %33 = tpu.matmul %26, %32, %cst_17 {dimension_numbers = #tpu.dot_dimension_numbers<[1], [0], [0], [1], [0, 0, 1, 1], [], []>} : vector<8x32xbf16>, vector<32x32xbf16>, vector<8x32xf32> -> vector<8x32xf32>
    %c0_18 = arith.constant 0 : index
    %c0_19 = arith.constant 0 : index
    %34 = vector.load %arg8[%c0_18, %c0_19] : memref<1x32xf32, #tpu.memory_space<vmem>>, vector<1x32xf32>
    %35 = vector.broadcast %34 : vector<1x32xf32> to vector<8x32xf32>
    %36 = arith.addf %33, %35 : vector<8x32xf32>
    %c0_20 = arith.constant 0 : index
    %c0_21 = arith.constant 0 : index
    %37 = vector.load %arg9[%c0_20, %c0_21] : memref<32x32xbf16, #tpu.memory_space<vmem>>, vector<32x32xbf16>
    %cst_22 = arith.constant dense<0.000000e+00> : vector<8x32xf32>
    %38 = tpu.matmul %26, %37, %cst_22 {dimension_numbers = #tpu.dot_dimension_numbers<[1], [0], [0], [1], [0, 0, 1, 1], [], []>} : vector<8x32xbf16>, vector<32x32xbf16>, vector<8x32xf32> -> vector<8x32xf32>
    %c0_23 = arith.constant 0 : index
    %c0_24 = arith.constant 0 : index
    %39 = vector.load %arg10[%c0_23, %c0_24] : memref<1x32xf32, #tpu.memory_space<vmem>>, vector<1x32xf32>
    %40 = vector.broadcast %39 : vector<1x32xf32> to vector<8x32xf32>
    %41 = arith.addf %38, %40 : vector<8x32xf32>
    %cst_25 = arith.constant 0.353553385 : f32
    %42 = vector.broadcast %cst_25 : f32 to vector<8x32xf32>
    %43 = arith.mulf %31, %42 : vector<8x32xf32>
    %44 = vector.shape_cast %43 : vector<8x32xf32> to vector<8x4x8xf32>
    %45 = tpu.transpose %44, [1, 0, 2] : vector<8x4x8xf32> -> vector<4x8x8xf32>
    %46 = arith.truncf %45 : vector<4x8x8xf32> to vector<4x8x8xbf16>
    %47 = vector.shape_cast %36 : vector<8x32xf32> to vector<8x4x8xf32>
    %48 = tpu.transpose %47, [1, 0, 2] : vector<8x4x8xf32> -> vector<4x8x8xf32>
    %49 = arith.truncf %48 : vector<4x8x8xf32> to vector<4x8x8xbf16>
    %50 = vector.shape_cast %41 : vector<8x32xf32> to vector<8x4x8xf32>
    %51 = tpu.transpose %50, [1, 0, 2] : vector<8x4x8xf32> -> vector<4x8x8xf32>
    %52 = arith.truncf %51 : vector<4x8x8xf32> to vector<4x8x8xbf16>
    "tpu.trace_start"() <{level = 10 : i32, message = "hqd,hkd->hqk"}> : () -> ()
    %cst_26 = arith.constant dense<0.000000e+00> : vector<4x8x8xf32>
    %53 = tpu.matmul %46, %49, %cst_26 {dimension_numbers = #tpu.dot_dimension_numbers<[2], [2], [1], [1], [0, 0, 0, 1, 1, 1], [0], [0]>} : vector<4x8x8xbf16>, vector<4x8x8xbf16>, vector<4x8x8xf32> -> vector<4x8x8xf32>
    "tpu.trace_stop"() : () -> ()
    %c0_27 = arith.constant 0 : index
    %c0_28 = arith.constant 0 : index
    %c0_29 = arith.constant 0 : index
    %c0_30 = arith.constant 0 : index
    %54 = vector.load %arg2[%c0_27, %c0_28, %c0_29, %c0_30] : memref<1x4x8x8xf32, #tpu.memory_space<vmem>>, vector<1x4x8x8xf32>
    %55 = vector.shape_cast %54 : vector<1x4x8x8xf32> to vector<4x8x8xf32>
    %56 = arith.addf %53, %55 : vector<4x8x8xf32>
    %cst_31 = arith.constant dense<0xFF800000> : vector<4x8xf32>
    %57 = vector.multi_reduction <maximumf>, %56, %cst_31 [2] : vector<4x8x8xf32> to vector<4x8xf32>
    %58 = vector.shape_cast %57 : vector<4x8xf32> to vector<4x8x1xf32>
    %59 = vector.broadcast %58 : vector<4x8x1xf32> to vector<4x8x8xf32>
    %60 = arith.subf %56, %59 : vector<4x8x8xf32>
    %61 = math.exp %60 : vector<4x8x8xf32>
    %cst_32 = arith.constant dense<0.000000e+00> : vector<4x8xf32>
    %62 = vector.multi_reduction <add>, %61, %cst_32 [2] : vector<4x8x8xf32> to vector<4x8xf32>
    %63 = vector.shape_cast %62 : vector<4x8xf32> to vector<4x8x1xf32>
    %64 = tpu.reciprocal %63 {approx = true} : vector<4x8x1xf32> -> vector<4x8x1xf32>
    %65 = vector.broadcast %64 : vector<4x8x1xf32> to vector<4x8x8xf32>
    %66 = arith.mulf %61, %65 : vector<4x8x8xf32>
    %67 = arith.truncf %66 : vector<4x8x8xf32> to vector<4x8x8xbf16>
    "tpu.trace_start"() <{level = 10 : i32, message = "hqk,hkd->hqd"}> : () -> ()
    %cst_33 = arith.constant dense<0.000000e+00> : vector<4x8x8xf32>
    %68 = tpu.matmul %67, %52, %cst_33 {dimension_numbers = #tpu.dot_dimension_numbers<[2], [1], [1], [2], [0, 0, 0, 1, 1, 2], [0], [0]>} : vector<4x8x8xbf16>, vector<4x8x8xbf16>, vector<4x8x8xf32> -> vector<4x8x8xf32>
    "tpu.trace_stop"() : () -> ()
    %69 = tpu.transpose %68, [1, 0, 2] : vector<4x8x8xf32> -> vector<8x4x8xf32>
    %70 = vector.shape_cast %69 : vector<8x4x8xf32> to vector<8x32xf32>
    %71 = arith.truncf %70 : vector<8x32xf32> to vector<8x32xbf16>
    %c0_34 = arith.constant 0 : index
    %c0_35 = arith.constant 0 : index
    %72 = vector.load %arg11[%c0_34, %c0_35] : memref<32x32xbf16, #tpu.memory_space<vmem>>, vector<32x32xbf16>
    %cst_36 = arith.constant dense<0.000000e+00> : vector<8x32xf32>
    %73 = tpu.matmul %71, %72, %cst_36 {dimension_numbers = #tpu.dot_dimension_numbers<[1], [0], [0], [1], [0, 0, 1, 1], [], []>} : vector<8x32xbf16>, vector<32x32xbf16>, vector<8x32xf32> -> vector<8x32xf32>
    %c0_37 = arith.constant 0 : index
    %c0_38 = arith.constant 0 : index
    %74 = vector.load %arg12[%c0_37, %c0_38] : memref<1x32xf32, #tpu.memory_space<vmem>>, vector<1x32xf32>
    %75 = vector.broadcast %74 : vector<1x32xf32> to vector<8x32xf32>
    %76 = arith.addf %73, %75 : vector<8x32xf32>
    %77 = arith.addf %1, %76 : vector<8x32xf32>
    %c0_39 = arith.constant 0 : index
    %c0_40 = arith.constant 0 : index
    %78 = vector.load %arg13[%c0_39, %c0_40] : memref<1x32xf32, #tpu.memory_space<vmem>>, vector<1x32xf32>
    %c0_41 = arith.constant 0 : index
    %c0_42 = arith.constant 0 : index
    %79 = vector.load %arg14[%c0_41, %c0_42] : memref<1x32xf32, #tpu.memory_space<vmem>>, vector<1x32xf32>
    %cst_43 = arith.constant dense<0.000000e+00> : vector<8xf32>
    %80 = vector.multi_reduction <add>, %77, %cst_43 [1] : vector<8x32xf32> to vector<8xf32>
    %81 = vector.shape_cast %80 : vector<8xf32> to vector<8x1xf32>
    %cst_44 = arith.constant 3.200000e+01 : f32
    %82 = vector.broadcast %cst_44 : f32 to vector<8x1xf32>
    %83 = arith.divf %81, %82 : vector<8x1xf32>
    %84 = vector.broadcast %83 : vector<8x1xf32> to vector<8x32xf32>
    %85 = arith.subf %77, %84 : vector<8x32xf32>
    %86 = arith.mulf %85, %85 : vector<8x32xf32>
    %cst_45 = arith.constant dense<0.000000e+00> : vector<8xf32>
    %87 = vector.multi_reduction <add>, %86, %cst_45 [1] : vector<8x32xf32> to vector<8xf32>
    %88 = vector.shape_cast %87 : vector<8xf32> to vector<8x1xf32>
    %cst_46 = arith.constant 3.200000e+01 : f32
    %89 = vector.broadcast %cst_46 : f32 to vector<8x1xf32>
    %90 = arith.divf %88, %89 : vector<8x1xf32>
    %91 = vector.broadcast %83 : vector<8x1xf32> to vector<8x32xf32>
    %92 = arith.subf %77, %91 : vector<8x32xf32>
    %cst_47 = arith.constant 9.99999974E-6 : f32
    %93 = vector.broadcast %cst_47 : f32 to vector<8x1xf32>
    %94 = arith.addf %90, %93 : vector<8x1xf32>
    %95 = math.rsqrt %94 : vector<8x1xf32>
    %96 = vector.broadcast %95 : vector<8x1xf32> to vector<8x32xf32>
    %97 = arith.mulf %92, %96 : vector<8x32xf32>
    %98 = vector.broadcast %78 : vector<1x32xf32> to vector<8x32xf32>
    %99 = arith.mulf %97, %98 : vector<8x32xf32>
    %100 = vector.broadcast %79 : vector<1x32xf32> to vector<8x32xf32>
    %101 = arith.addf %99, %100 : vector<8x32xf32>
    %102 = arith.truncf %101 : vector<8x32xf32> to vector<8x32xbf16>
    %c0_48 = arith.constant 0 : index
    %c0_49 = arith.constant 0 : index
    %103 = vector.load %arg15[%c0_48, %c0_49] : memref<32x64xbf16, #tpu.memory_space<vmem>>, vector<32x64xbf16>
    %cst_50 = arith.constant dense<0.000000e+00> : vector<8x64xf32>
    %104 = tpu.matmul %102, %103, %cst_50 {dimension_numbers = #tpu.dot_dimension_numbers<[1], [0], [0], [1], [0, 0, 1, 1], [], []>} : vector<8x32xbf16>, vector<32x64xbf16>, vector<8x64xf32> -> vector<8x64xf32>
    %c0_51 = arith.constant 0 : index
    %c0_52 = arith.constant 0 : index
    %105 = vector.load %arg16[%c0_51, %c0_52] : memref<1x64xf32, #tpu.memory_space<vmem>>, vector<1x64xf32>
    %106 = vector.broadcast %105 : vector<1x64xf32> to vector<8x64xf32>
    %107 = arith.addf %104, %106 : vector<8x64xf32>
    %cst_53 = arith.constant 5.000000e-01 : f32
    %108 = vector.broadcast %cst_53 : f32 to vector<8x64xf32>
    %109 = arith.mulf %108, %107 : vector<8x64xf32>
    %cst_54 = arith.constant 0.707106769 : f32
    %110 = vector.broadcast %cst_54 : f32 to vector<8x64xf32>
    %111 = arith.mulf %107, %110 : vector<8x64xf32>
    %112 = math.erf %111 : vector<8x64xf32>
    %cst_55 = arith.constant 1.000000e+00 : f32
    %113 = vector.broadcast %cst_55 : f32 to vector<8x64xf32>
    %114 = arith.addf %113, %112 : vector<8x64xf32>
    %115 = arith.mulf %109, %114 : vector<8x64xf32>
    %116 = arith.truncf %115 : vector<8x64xf32> to vector<8x64xbf16>
    %c0_56 = arith.constant 0 : index
    %c0_57 = arith.constant 0 : index
    %117 = vector.load %arg17[%c0_56, %c0_57] : memref<64x32xbf16, #tpu.memory_space<vmem>>, vector<64x32xbf16>
    %cst_58 = arith.constant dense<0.000000e+00> : vector<8x32xf32>
    %118 = tpu.matmul %116, %117, %cst_58 {dimension_numbers = #tpu.dot_dimension_numbers<[1], [0], [0], [1], [0, 0, 1, 1], [], []>} : vector<8x64xbf16>, vector<64x32xbf16>, vector<8x32xf32> -> vector<8x32xf32>
    %c0_59 = arith.constant 0 : index
    %c0_60 = arith.constant 0 : index
    %119 = vector.load %arg18[%c0_59, %c0_60] : memref<1x32xf32, #tpu.memory_space<vmem>>, vector<1x32xf32>
    %120 = vector.broadcast %119 : vector<1x32xf32> to vector<8x32xf32>
    %121 = arith.addf %118, %120 : vector<8x32xf32>
    %122 = arith.addf %77, %121 : vector<8x32xf32>
    %c0_61 = arith.constant 0 : index
    %c0_62 = arith.constant 0 : index
    %c0_63 = arith.constant 0 : index
    %123 = vector.load %arg19[%c0_61, %c0_62, %c0_63] : memref<1x8x32xf32, #tpu.memory_space<vmem>>, vector<1x8x32xf32>
    %124 = vector.shape_cast %123 : vector<1x8x32xf32> to vector<8x32xf32>
    %125 = vector.shape_cast %122 : vector<8x32xf32> to vector<1x8x32xf32>
    tpu.vector_store %arg19[%c0_61, %c0_62, %c0_63], %125 {strides = array<i32>} : memref<1x8x32xf32, #tpu.memory_space<vmem>>, vector<1x8x32xf32>,
    return
  }
  func.func @transform_0(%arg0: i32) -> (i32, i32, i32) {
    %c0_i32 = arith.constant 0 : i32
    %c0_i32_0 = arith.constant 0 : i32
    %c0_i32_1 = arith.constant 0 : i32
    return %arg0, %c0_i32, %c0_i32_0 : i32, i32, i32
  }
  func.func @transform_1(%arg0: i32) -> (i32, i32, i32, i32) {
    %c0_i32 = arith.constant 0 : i32
    %c0_i32_0 = arith.constant 0 : i32
    %c0_i32_1 = arith.constant 0 : i32
    %c0_i32_2 = arith.constant 0 : i32
    return %arg0, %c0_i32, %c0_i32_0, %c0_i32_1 : i32, i32, i32, i32
  }
  func.func @transform_2(%arg0: i32) -> (i32, i32) {
    %c0_i32 = arith.constant 0 : i32
    %c0_i32_0 = arith.constant 0 : i32
    %c0_i32_1 = arith.constant 0 : i32
    return %c0_i32, %c0_i32_0 : i32, i32
  }
  func.func @transform_3(%arg0: i32) -> (i32, i32) {
    %c0_i32 = arith.constant 0 : i32
    %c0_i32_0 = arith.constant 0 : i32
    %c0_i32_1 = arith.constant 0 : i32
    return %c0_i32, %c0_i32_0 : i32, i32
  }
  func.func @transform_4(%arg0: i32) -> (i32, i32) {
    %c0_i32 = arith.constant 0 : i32
    %c0_i32_0 = arith.constant 0 : i32
    %c0_i32_1 = arith.constant 0 : i32
    return %c0_i32, %c0_i32_0 : i32, i32
  }
  func.func @transform_5(%arg0: i32) -> (i32, i32) {
    %c0_i32 = arith.constant 0 : i32
    %c0_i32_0 = arith.constant 0 : i32
    %c0_i32_1 = arith.constant 0 : i32
    return %c0_i32, %c0_i32_0 : i32, i32
  }
  func.func @transform_6(%arg0: i32) -> (i32, i32) {
    %c0_i32 = arith.constant 0 : i32
    %c0_i32_0 = arith.constant 0 : i32
    %c0_i32_1 = arith.constant 0 : i32
    return %c0_i32, %c0_i32_0 : i32, i32
  }
  func.func @transform_7(%arg0: i32) -> (i32, i32) {
    %c0_i32 = arith.constant 0 : i32
    %c0_i32_0 = arith.constant 0 : i32
    %c0_i32_1 = arith.constant 0 : i32
    return %c0_i32, %c0_i32_0 : i32, i32
  }
  func.func @transform_8(%arg0: i32) -> (i32, i32) {
    %c0_i32 = arith.constant 0 : i32
    %c0_i32_0 = arith.constant 0 : i32
    %c0_i32_1 = arith.constant 0 : i32
    return %c0_i32, %c0_i32_0 : i32, i32
  }
  func.func @transform_9(%arg0: i32) -> (i32, i32) {
    %c0_i32 = arith.constant 0 : i32
    %c0_i32_0 = arith.constant 0 : i32
    %c0_i32_1 = arith.constant 0 : i32
    return %c0_i32, %c0_i32_0 : i32, i32
  }
  func.func @transform_10(%arg0: i32) -> (i32, i32) {
    %c0_i32 = arith.constant 0 : i32
    %c0_i32_0 = arith.constant 0 : i32
    %c0_i32_1 = arith.constant 0 : i32
    return %c0_i32, %c0_i32_0 : i32, i32
  }
  func.func @transform_11(%arg0: i32) -> (i32, i32) {
    %c0_i32 = arith.constant 0 : i32
    %c0_i32_0 = arith.constant 0 : i32
    %c0_i32_1 = arith.constant 0 : i32
    return %c0_i32, %c0_i32_0 : i32, i32
  }
  func.func @transform_12(%arg0: i32) -> (i32, i32) {
    %c0_i32 = arith.constant 0 : i32
    %c0_i32_0 = arith.constant 0 : i32
    %c0_i32_1 = arith.constant 0 : i32
    return %c0_i32, %c0_i32_0 : i32, i32
  }
  func.func @transform_13(%arg0: i32) -> (i32, i32) {
    %c0_i32 = arith.constant 0 : i32
    %c0_i32_0 = arith.constant 0 : i32
    %c0_i32_1 = arith.constant 0 : i32
    return %c0_i32, %c0_i32_0 : i32, i32
  }
  func.func @transform_14(%arg0: i32) -> (i32, i32) {
    %c0_i32 = arith.constant 0 : i32
    %c0_i32_0 = arith.constant 0 : i32
    %c0_i32_1 = arith.constant 0 : i32
    return %c0_i32, %c0_i32_0 : i32, i32
  }
  func.func @transform_15(%arg0: i32) -> (i32, i32) {
    %c0_i32 = arith.constant 0 : i32
    %c0_i32_0 = arith.constant 0 : i32
    %c0_i32_1 = arith.constant 0 : i32
    return %c0_i32, %c0_i32_0 : i32, i32
  }
  func.func @transform_16(%arg0: i32) -> (i32, i32) {
    %c0_i32 = arith.constant 0 : i32
    %c0_i32_0 = arith.constant 0 : i32
    %c0_i32_1 = arith.constant 0 : i32
    return %c0_i32, %c0_i32_0 : i32, i32
  }
  func.func @transform_17(%arg0: i32) -> (i32, i32) {
    %c0_i32 = arith.constant 0 : i32
    %c0_i32_0 = arith.constant 0 : i32
    %c0_i32_1 = arith.constant 0 : i32
    return %c0_i32, %c0_i32_0 : i32, i32
  }
  func.func @transform_18(%arg0: i32) -> (i32, i32, i32) {
    %c0_i32 = arith.constant 0 : i32
    %c0_i32_0 = arith.constant 0 : i32
    %c0_i32_1 = arith.constant 0 : i32
    return %arg0, %c0_i32, %c0_i32_0 : i32, i32, i32
  }
}

</mosaic_0001>

<llo_original>
// kernel: tpu_custom_call.1
$region0: #{tpu_custom_call.1}
  #allocation0 [shape = 'u32[]', space=smem, size = 0x4, offset = 0x4, fixed_abs, tag = 'smem constant byte address 0x4 - core index']
  #allocation1 [shape = 'u32[144,128]{1,0:T(1,128)}', space=vmem, size = 0x12000, scoped, tag = 'internal scratch']
  %s0 = inlined_call_operand.vmem [shape: f32[2,8,32], index: 0, kind: input, shape index: {}]
  %s1 = inlined_call_operand.hbm [shape: f32[2,4,8,8], index: 1, kind: input, shape index: {}]
  %s2 = inlined_call_operand.hbm [shape: f32[1,32], index: 2, kind: input, shape index: {}]
  %s3 = inlined_call_operand.hbm [shape: f32[1,32], index: 3, kind: input, shape index: {}]
  %s4 = inlined_call_operand.vmem [shape: bf16[32,32], index: 4, kind: input, shape index: {}]
  %s5 = inlined_call_operand.hbm [shape: f32[1,32], index: 5, kind: input, shape index: {}]
  %s6 = inlined_call_operand.vmem [shape: bf16[32,32], index: 6, kind: input, shape index: {}]
  %s7 = inlined_call_operand.hbm [shape: f32[1,32], index: 7, kind: input, shape index: {}]
  %s8 = inlined_call_operand.hbm [shape: bf16[32,32], index: 8, kind: input, shape index: {}]
  %s9 = inlined_call_operand.hbm [shape: f32[1,32], index: 9, kind: input, shape index: {}]
  %s10 = inlined_call_operand.vmem [shape: bf16[32,32], index: 10, kind: input, shape index: {}]
  %s11 = inlined_call_operand.vmem [shape: f32[1,32], index: 11, kind: input, shape index: {}]
  %s12 = inlined_call_operand.vmem [shape: f32[1,32], index: 12, kind: input, shape index: {}]
  %s13 = inlined_call_operand.vmem [shape: f32[1,32], index: 13, kind: input, shape index: {}]
  %s14 = inlined_call_operand.hbm [shape: bf16[32,64], index: 14, kind: input, shape index: {}]
  %s15 = inlined_call_operand.vmem [shape: f32[1,64], index: 15, kind: input, shape index: {}]
  %s16 = inlined_call_operand.vmem [shape: bf16[64,32], index: 16, kind: input, shape index: {}]
  %s17 = inlined_call_operand.vmem [shape: f32[1,32], index: 17, kind: input, shape index: {}]
  %s18 = inlined_call_operand.hbm [shape: f32[2,8,32], index: 18, kind: output, shape index: {}]
  %s19 = sld [smem:[#allocation0]]
  $region137: #{tpu_custom_call.1} parent=0
    _
  %s21 = ssub.s32 1, %s19
  %s22 = scalar_select 0, %s21, %s19
  $region1: #{tpu_custom_call.1} parent=0
    #allocation2 [shape = 'u8[32768]{0}', space=vmem, size = 0x8000, scoped, tag = 'input window, operand 1']
    #allocation3 [shape = 's32[2]{0}', space=sflag, size = 0x8, scoped, tag = 'scoped memory for tpu_custom_call.1']
    #allocation4 [shape = 's32[2]{0}', space=sflag, size = 0x8, scoped, tag = 'scoped memory for tpu_custom_call.1']
    #allocation5 [shape = 'u8[512]{0}', space=vmem, size = 0x400, scoped, tag = 'input window, operand 2, single buffered']
    #allocation6 [shape = 's32[1]{0}', space=sflag, size = 0x4, scoped, tag = 'scoped memory for tpu_custom_call.1']
    #allocation7 [shape = 'u8[512]{0}', space=vmem, size = 0x400, scoped, tag = 'input window, operand 3, single buffered']
    #allocation8 [shape = 'u8[512]{0}', space=vmem, size = 0x400, scoped, tag = 'input window, operand 5, single buffered']
    #allocation9 [shape = 's32[1]{0}', space=sflag, size = 0x4, scoped, tag = 'scoped memory for tpu_custom_call.1']
    #allocation10 [shape = 'u8[512]{0}', space=vmem, size = 0x400, scoped, tag = 'input window, operand 7, single buffered']
    #allocation11 [shape = 'u8[8192]{0}', space=vmem, size = 0x2000, scoped, tag = 'input window, operand 8, single buffered']
    #allocation12 [shape = 's32[1]{0}', space=sflag, size = 0x4, scoped, tag = 'scoped memory for tpu_custom_call.1']
    #allocation13 [shape = 'u8[512]{0}', space=vmem, size = 0x400, scoped, tag = 'input window, operand 9, single buffered']
    #allocation14 [shape = 'u8[8192]{0}', space=vmem, size = 0x2000, scoped, tag = 'input window, operand 14, single buffered']
    #allocation15 [shape = 's32[1]{0}', space=sflag, size = 0x4, scoped, tag = 'scoped memory for tpu_custom_call.1']
    #allocation16 [shape = 'u8[8192]{0}', space=vmem, size = 0x2000, scoped, tag = 'output window, operand 0']
    %23 = vsyncpa [#allocation3], 0
    %s24 = scalar_lea.sflag [#allocation3], 1
    %25 = vsyncpa %s24, 0
    %26 = vsyncpa [#allocation6], 0
    %27 = vsyncpa [#allocation9], 0
    %28 = vsyncpa [#allocation12], 0
    %29 = vsyncpa [#allocation15], 0
    %30 = vsyncpa [#allocation4], 0
    %s31 = scalar_lea.sflag [#allocation4], 1
    %32 = vsyncpa %s31, 0
    loop: start=0, step=1, limit=4
    $region2: #{tpu_custom_call.1} parent=1 // loop_pre_header
      _
    $region3: #{tpu_custom_call.1} parent=1 // loop_header
      %s34 = sphi 0, %s38
      %p35 = scmp.ge.s32.totalorder %s34, 4
      %s44 = sphi 0, %s46
      %s47 = sphi 0, %s44
      %s48 = sphi 0, %s47
      %s64 = sphi 0, %s48
      %s70 = sphi 0, %s72
      %s73 = sphi 0, %s70
      %s74 = sphi 0, %s73
      %s90 = sphi 0, %s74
      %s94 = sphi 0, %s94
      %s96 = sphi 0, %s94
      %s97 = sphi 0, %s96
      %s111 = sphi 0, %s97
      %s115 = sphi 0, %s115
      %s117 = sphi 0, %s115
      %s118 = sphi 0, %s117
      %s132 = sphi 0, %s118
      %s136 = sphi 0, %s136
      %s138 = sphi 0, %s136
      %s139 = sphi 0, %s138
      %s153 = sphi 0, %s139
      %s157 = sphi 0, %s157
      %s159 = sphi 0, %s157
      %s160 = sphi 0, %s159
      %s174 = sphi 0, %s160
      %s178 = sphi 0, %s178
      %s180 = sphi 0, %s178
      %s181 = sphi 0, %s180
      %s195 = sphi 0, %s181
      %s199 = sphi 0, %s199
      %s201 = sphi 0, %s199
      %s202 = sphi 0, %s201
      %s216 = sphi 0, %s202
      %s220 = sphi 0, %s220
      %s222 = sphi 0, %s220
      %s223 = sphi 0, %s222
      %s237 = sphi 0, %s223
      %s241 = sphi 0, %s241
      %s243 = sphi 0, %s241
      %s244 = sphi 0, %s243
      %s258 = sphi 0, %s244
      %s262 = sphi 0, %s262
      %s264 = sphi 0, %s262
      %s265 = sphi 0, %s264
      %s279 = sphi 0, %s265
      %s283 = sphi 0, %s283
      %s285 = sphi 0, %s283
      %s286 = sphi 0, %s285
      %s300 = sphi 0, %s286
      %s304 = sphi 0, %s304
      %s306 = sphi 0, %s304
      %s307 = sphi 0, %s306
      %s321 = sphi 0, %s307
      %s325 = sphi 0, %s325
      %s327 = sphi 0, %s325
      %s328 = sphi 0, %s327
      %s342 = sphi 0, %s328
      %s346 = sphi 0, %s346
      %s348 = sphi 0, %s346
      %s349 = sphi 0, %s348
      %s363 = sphi 0, %s349
      %s367 = sphi 0, %s367
      %s369 = sphi 0, %s367
      %s370 = sphi 0, %s369
      %s384 = sphi 0, %s370
      %s388 = sphi 0, %s388
      %s390 = sphi 0, %s388
      %s391 = sphi 0, %s390
      %s405 = sphi 0, %s391
      %s409 = sphi 0, %s409
      %s411 = sphi 0, %s409
      %s412 = sphi 0, %s411
      %s426 = sphi 0, %s412
      %s432 = sphi 0, %s434
      %s435 = sphi 0, %s432
      %s436 = sphi 0, %s435
      %s452 = sphi 0, %s436
    $region4: #{tpu_custom_call.1} parent=1 // loop_header_branch
      %37 = sbr.rel (%p35) target = $region8
    $region5: #{tpu_custom_call.1} parent=1 // loop_body
      %s39 = ssub.s32 %s34, 1
      %s40 = ssub.s32 %s34, 2
      %s41 = sadd.s32 %s34, 1
      %s42 = ssub.s32 %s34, %s41
      %p43 = scmp.eq.s32.totalorder %s42, 0
      %s45 = sadd.s32 %s44, 1
      %s46 = scalar_select %p43, %s44, %s45
      %p49 = pneg %p43
      %p50 = scmp.eq.s32.totalorder %s34, 1
      %p51 = por %p49, %p50
      %p52 = scmp.ne.s32.totalorder %s44, %s47
      %p53 = scmp.eq.s32.totalorder %s34, 0
      %p54 = por %p52, %p53
      %p55 = scmp.ne.s32.totalorder %s44, %s47
      %p56 = scmp.eq.s32.totalorder %s39, 1
      %p57 = por %p55, %p56
      %p58 = scmp.ne.s32.totalorder %s47, %s48
      %p59 = scmp.eq.s32.totalorder %s39, 0
      %p60 = por %p58, %p59
      %p61 = scmp.ne.s32.totalorder %s47, %s48
      %p62 = scmp.eq.s32.totalorder %s40, 1
      %p63 = por %p61, %p62
      %p65 = scmp.ne.s32.totalorder %s48, %s64
      %p66 = scmp.eq.s32.totalorder %s40, 0
      %p67 = por %p65, %p66
      %s68 = ssub.s32 %s34, %s41
      %p69 = scmp.eq.s32.totalorder %s68, 0
      %s71 = sadd.s32 %s70, 1
      %s72 = scalar_select %p69, %s70, %s71
      %p75 = pneg %p69
      %p76 = scmp.eq.s32.totalorder %s34, 1
      %p77 = por %p75, %p76
      %p78 = scmp.ne.s32.totalorder %s70, %s73
      %p79 = scmp.eq.s32.totalorder %s34, 0
      %p80 = por %p78, %p79
      %p81 = scmp.ne.s32.totalorder %s70, %s73
      %p82 = scmp.eq.s32.totalorder %s39, 1
      %p83 = por %p81, %p82
      %p84 = scmp.ne.s32.totalorder %s73, %s74
      %p85 = scmp.eq.s32.totalorder %s39, 0
      %p86 = por %p84, %p85
      %p87 = scmp.ne.s32.totalorder %s73, %s74
      %p88 = scmp.eq.s32.totalorder %s40, 1
      %p89 = por %p87, %p88
      %p91 = scmp.ne.s32.totalorder %s74, %s90
      %p92 = scmp.eq.s32.totalorder %s40, 0
      %p93 = por %p91, %p92
      %s95 = sadd.s32 %s94, 1
      %p98 = scmp.eq.s32.totalorder %s34, 1
      %p99 = scmp.ne.s32.totalorder %s94, %s96
      %p100 = scmp.eq.s32.totalorder %s34, 0
      %p101 = por %p99, %p100
      %p102 = scmp.ne.s32.totalorder %s94, %s96
      %p103 = scmp.eq.s32.totalorder %s39, 1
      %p104 = por %p102, %p103
      %p105 = scmp.ne.s32.totalorder %s96, %s97
      %p106 = scmp.eq.s32.totalorder %s39, 0
      %p107 = por %p105, %p106
      %p108 = scmp.ne.s32.totalorder %s96, %s97
      %p109 = scmp.eq.s32.totalorder %s40, 1
      %p110 = por %p108, %p109
      %p112 = scmp.ne.s32.totalorder %s97, %s111
      %p113 = scmp.eq.s32.totalorder %s40, 0
      %p114 = por %p112, %p113
      %s116 = sadd.s32 %s115, 1
      %p119 = scmp.eq.s32.totalorder %s34, 1
      %p120 = scmp.ne.s32.totalorder %s115, %s117
      %p121 = scmp.eq.s32.totalorder %s34, 0
      %p122 = por %p120, %p121
      %p123 = scmp.ne.s32.totalorder %s115, %s117
      %p124 = scmp.eq.s32.totalorder %s39, 1
      %p125 = por %p123, %p124
      %p126 = scmp.ne.s32.totalorder %s117, %s118
      %p127 = scmp.eq.s32.totalorder %s39, 0
      %p128 = por %p126, %p127
      %p129 = scmp.ne.s32.totalorder %s117, %s118
      %p130 = scmp.eq.s32.totalorder %s40, 1
      %p131 = por %p129, %p130
      %p133 = scmp.ne.s32.totalorder %s118, %s132
      %p134 = scmp.eq.s32.totalorder %s40, 0
      %p135 = por %p133, %p134
      %s137 = sadd.s32 %s136, 1
      %p140 = scmp.eq.s32.totalorder %s34, 1
      %p141 = scmp.ne.s32.totalorder %s136, %s138
      %p142 = scmp.eq.s32.totalorder %s34, 0
      %p143 = por %p141, %p142
      %p144 = scmp.ne.s32.totalorder %s136, %s138
      %p145 = scmp.eq.s32.totalorder %s39, 1
      %p146 = por %p144, %p145
      %p147 = scmp.ne.s32.totalorder %s138, %s139
      %p148 = scmp.eq.s32.totalorder %s39, 0
      %p149 = por %p147, %p148
      %p150 = scmp.ne.s32.totalorder %s138, %s139
      %p151 = scmp.eq.s32.totalorder %s40, 1
      %p152 = por %p150, %p151
      %p154 = scmp.ne.s32.totalorder %s139, %s153
      %p155 = scmp.eq.s32.totalorder %s40, 0
      %p156 = por %p154, %p155
      %s158 = sadd.s32 %s157, 1
      %p161 = scmp.eq.s32.totalorder %s34, 1
      %p162 = scmp.ne.s32.totalorder %s157, %s159
      %p163 = scmp.eq.s32.totalorder %s34, 0
      %p164 = por %p162, %p163
      %p165 = scmp.ne.s32.totalorder %s157, %s159
      %p166 = scmp.eq.s32.totalorder %s39, 1
      %p167 = por %p165, %p166
      %p168 = scmp.ne.s32.totalorder %s159, %s160
      %p169 = scmp.eq.s32.totalorder %s39, 0
      %p170 = por %p168, %p169
      %p171 = scmp.ne.s32.totalorder %s159, %s160
      %p172 = scmp.eq.s32.totalorder %s40, 1
      %p173 = por %p171, %p172
      %p175 = scmp.ne.s32.totalorder %s160, %s174
      %p176 = scmp.eq.s32.totalorder %s40, 0
      %p177 = por %p175, %p176
      %s179 = sadd.s32 %s178, 1
      %p182 = scmp.eq.s32.totalorder %s34, 1
      %p183 = scmp.ne.s32.totalorder %s178, %s180
      %p184 = scmp.eq.s32.totalorder %s34, 0
      %p185 = por %p183, %p184
      %p186 = scmp.ne.s32.totalorder %s178, %s180
      %p187 = scmp.eq.s32.totalorder %s39, 1
      %p188 = por %p186, %p187
      %p189 = scmp.ne.s32.totalorder %s180, %s181
      %p190 = scmp.eq.s32.totalorder %s39, 0
      %p191 = por %p189, %p190
      %p192 = scmp.ne.s32.totalorder %s180, %s181
      %p193 = scmp.eq.s32.totalorder %s40, 1
      %p194 = por %p192, %p193
      %p196 = scmp.ne.s32.totalorder %s181, %s195
      %p197 = scmp.eq.s32.totalorder %s40, 0
      %p198 = por %p196, %p197
      %s200 = sadd.s32 %s199, 1
      %p203 = scmp.eq.s32.totalorder %s34, 1
      %p204 = scmp.ne.s32.totalorder %s199, %s201
      %p205 = scmp.eq.s32.totalorder %s34, 0
      %p206 = por %p204, %p205
      %p207 = scmp.ne.s32.totalorder %s199, %s201
      %p208 = scmp.eq.s32.totalorder %s39, 1
      %p209 = por %p207, %p208
      %p210 = scmp.ne.s32.totalorder %s201, %s202
      %p211 = scmp.eq.s32.totalorder %s39, 0
      %p212 = por %p210, %p211
      %p213 = scmp.ne.s32.totalorder %s201, %s202
      %p214 = scmp.eq.s32.totalorder %s40, 1
      %p215 = por %p213, %p214
      %p217 = scmp.ne.s32.totalorder %s202, %s216
      %p218 = scmp.eq.s32.totalorder %s40, 0
      %p219 = por %p217, %p218
      %s221 = sadd.s32 %s220, 1
      %p224 = scmp.eq.s32.totalorder %s34, 1
      %p225 = scmp.ne.s32.totalorder %s220, %s222
      %p226 = scmp.eq.s32.totalorder %s34, 0
      %p227 = por %p225, %p226
      %p228 = scmp.ne.s32.totalorder %s220, %s222
      %p229 = scmp.eq.s32.totalorder %s39, 1
      %p230 = por %p228, %p229
      %p231 = scmp.ne.s32.totalorder %s222, %s223
      %p232 = scmp.eq.s32.totalorder %s39, 0
      %p233 = por %p231, %p232
      %p234 = scmp.ne.s32.totalorder %s222, %s223
      %p235 = scmp.eq.s32.totalorder %s40, 1
      %p236 = por %p234, %p235
      %p238 = scmp.ne.s32.totalorder %s223, %s237
      %p239 = scmp.eq.s32.totalorder %s40, 0
      %p240 = por %p238, %p239
      %s242 = sadd.s32 %s241, 1
      %p245 = scmp.eq.s32.totalorder %s34, 1
      %p246 = scmp.ne.s32.totalorder %s241, %s243
      %p247 = scmp.eq.s32.totalorder %s34, 0
      %p248 = por %p246, %p247
      %p249 = scmp.ne.s32.totalorder %s241, %s243
      %p250 = scmp.eq.s32.totalorder %s39, 1
      %p251 = por %p249, %p250
      %p252 = scmp.ne.s32.totalorder %s243, %s244
      %p253 = scmp.eq.s32.totalorder %s39, 0
      %p254 = por %p252, %p253
      %p255 = scmp.ne.s32.totalorder %s243, %s244
      %p256 = scmp.eq.s32.totalorder %s40, 1
      %p257 = por %p255, %p256
      %p259 = scmp.ne.s32.totalorder %s244, %s258
      %p260 = scmp.eq.s32.totalorder %s40, 0
      %p261 = por %p259, %p260
      %s263 = sadd.s32 %s262, 1
      %p266 = scmp.eq.s32.totalorder %s34, 1
      %p267 = scmp.ne.s32.totalorder %s262, %s264
      %p268 = scmp.eq.s32.totalorder %s34, 0
      %p269 = por %p267, %p268
      %p270 = scmp.ne.s32.totalorder %s262, %s264
      %p271 = scmp.eq.s32.totalorder %s39, 1
      %p272 = por %p270, %p271
      %p273 = scmp.ne.s32.totalorder %s264, %s265
      %p274 = scmp.eq.s32.totalorder %s39, 0
      %p275 = por %p273, %p274
      %p276 = scmp.ne.s32.totalorder %s264, %s265
      %p277 = scmp.eq.s32.totalorder %s40, 1
      %p278 = por %p276, %p277
      %p280 = scmp.ne.s32.totalorder %s265, %s279
      %p281 = scmp.eq.s32.totalorder %s40, 0
      %p282 = por %p280, %p281
      %s284 = sadd.s32 %s283, 1
      %p287 = scmp.eq.s32.totalorder %s34, 1
      %p288 = scmp.ne.s32.totalorder %s283, %s285
      %p289 = scmp.eq.s32.totalorder %s34, 0
      %p290 = por %p288, %p289
      %p291 = scmp.ne.s32.totalorder %s283, %s285
      %p292 = scmp.eq.s32.totalorder %s39, 1
      %p293 = por %p291, %p292
      %p294 = scmp.ne.s32.totalorder %s285, %s286
      %p295 = scmp.eq.s32.totalorder %s39, 0
      %p296 = por %p294, %p295
      %p297 = scmp.ne.s32.totalorder %s285, %s286
      %p298 = scmp.eq.s32.totalorder %s40, 1
      %p299 = por %p297, %p298
      %p301 = scmp.ne.s32.totalorder %s286, %s300
      %p302 = scmp.eq.s32.totalorder %s40, 0
      %p303 = por %p301, %p302
      %s305 = sadd.s32 %s304, 1
      %p308 = scmp.eq.s32.totalorder %s34, 1
      %p309 = scmp.ne.s32.totalorder %s304, %s306
      %p310 = scmp.eq.s32.totalorder %s34, 0
      %p311 = por %p309, %p310
      %p312 = scmp.ne.s32.totalorder %s304, %s306
      %p313 = scmp.eq.s32.totalorder %s39, 1
      %p314 = por %p312, %p313
      %p315 = scmp.ne.s32.totalorder %s306, %s307
      %p316 = scmp.eq.s32.totalorder %s39, 0
      %p317 = por %p315, %p316
      %p318 = scmp.ne.s32.totalorder %s306, %s307
      %p319 = scmp.eq.s32.totalorder %s40, 1
      %p320 = por %p318, %p319
      %p322 = scmp.ne.s32.totalorder %s307, %s321
      %p323 = scmp.eq.s32.totalorder %s40, 0
      %p324 = por %p322, %p323
      %s326 = sadd.s32 %s325, 1
      %p329 = scmp.eq.s32.totalorder %s34, 1
      %p330 = scmp.ne.s32.totalorder %s325, %s327
      %p331 = scmp.eq.s32.totalorder %s34, 0
      %p332 = por %p330, %p331
      %p333 = scmp.ne.s32.totalorder %s325, %s327
      %p334 = scmp.eq.s32.totalorder %s39, 1
      %p335 = por %p333, %p334
      %p336 = scmp.ne.s32.totalorder %s327, %s328
      %p337 = scmp.eq.s32.totalorder %s39, 0
      %p338 = por %p336, %p337
      %p339 = scmp.ne.s32.totalorder %s327, %s328
      %p340 = scmp.eq.s32.totalorder %s40, 1
      %p341 = por %p339, %p340
      %p343 = scmp.ne.s32.totalorder %s328, %s342
      %p344 = scmp.eq.s32.totalorder %s40, 0
      %p345 = por %p343, %p344
      %s347 = sadd.s32 %s346, 1
      %p350 = scmp.eq.s32.totalorder %s34, 1
      %p351 = scmp.ne.s32.totalorder %s346, %s348
      %p352 = scmp.eq.s32.totalorder %s34, 0
      %p353 = por %p351, %p352
      %p354 = scmp.ne.s32.totalorder %s346, %s348
      %p355 = scmp.eq.s32.totalorder %s39, 1
      %p356 = por %p354, %p355
      %p357 = scmp.ne.s32.totalorder %s348, %s349
      %p358 = scmp.eq.s32.totalorder %s39, 0
      %p359 = por %p357, %p358
      %p360 = scmp.ne.s32.totalorder %s348, %s349
      %p361 = scmp.eq.s32.totalorder %s40, 1
      %p362 = por %p360, %p361
      %p364 = scmp.ne.s32.totalorder %s349, %s363
      %p365 = scmp.eq.s32.totalorder %s40, 0
      %p366 = por %p364, %p365
      %s368 = sadd.s32 %s367, 1
      %p371 = scmp.eq.s32.totalorder %s34, 1
      %p372 = scmp.ne.s32.totalorder %s367, %s369
      %p373 = scmp.eq.s32.totalorder %s34, 0
      %p374 = por %p372, %p373
      %p375 = scmp.ne.s32.totalorder %s367, %s369
      %p376 = scmp.eq.s32.totalorder %s39, 1
      %p377 = por %p375, %p376
      %p378 = scmp.ne.s32.totalorder %s369, %s370
      %p379 = scmp.eq.s32.totalorder %s39, 0
      %p380 = por %p378, %p379
      %p381 = scmp.ne.s32.totalorder %s369, %s370
      %p382 = scmp.eq.s32.totalorder %s40, 1
      %p383 = por %p381, %p382
      %p385 = scmp.ne.s32.totalorder %s370, %s384
      %p386 = scmp.eq.s32.totalorder %s40, 0
      %p387 = por %p385, %p386
      %s389 = sadd.s32 %s388, 1
      %p392 = scmp.eq.s32.totalorder %s34, 1
      %p393 = scmp.ne.s32.totalorder %s388, %s390
      %p394 = scmp.eq.s32.totalorder %s34, 0
      %p395 = por %p393, %p394
      %p396 = scmp.ne.s32.totalorder %s388, %s390
      %p397 = scmp.eq.s32.totalorder %s39, 1
      %p398 = por %p396, %p397
      %p399 = scmp.ne.s32.totalorder %s390, %s391
      %p400 = scmp.eq.s32.totalorder %s39, 0
      %p401 = por %p399, %p400
      %p402 = scmp.ne.s32.totalorder %s390, %s391
      %p403 = scmp.eq.s32.totalorder %s40, 1
      %p404 = por %p402, %p403
      %p406 = scmp.ne.s32.totalorder %s391, %s405
      %p407 = scmp.eq.s32.totalorder %s40, 0
      %p408 = por %p406, %p407
      %s410 = sadd.s32 %s409, 1
      %p413 = scmp.eq.s32.totalorder %s34, 1
      %p414 = scmp.ne.s32.totalorder %s409, %s411
      %p415 = scmp.eq.s32.totalorder %s34, 0
      %p416 = por %p414, %p415
      %p417 = scmp.ne.s32.totalorder %s409, %s411
      %p418 = scmp.eq.s32.totalorder %s39, 1
      %p419 = por %p417, %p418
      %p420 = scmp.ne.s32.totalorder %s411, %s412
      %p421 = scmp.eq.s32.totalorder %s39, 0
      %p422 = por %p420, %p421
      %p423 = scmp.ne.s32.totalorder %s411, %s412
      %p424 = scmp.eq.s32.totalorder %s40, 1
      %p425 = por %p423, %p424
      %p427 = scmp.ne.s32.totalorder %s412, %s426
      %p428 = scmp.eq.s32.totalorder %s40, 0
      %p429 = por %p427, %p428
      %s430 = ssub.s32 %s34, %s41
      %p431 = scmp.eq.s32.totalorder %s430, 0
      %s433 = sadd.s32 %s432, 1
      %s434 = scalar_select %p431, %s432, %s433
      %p437 = pneg %p431
      %p438 = scmp.eq.s32.totalorder %s34, 1
      %p439 = por %p437, %p438
      %p440 = scmp.ne.s32.totalorder %s432, %s435
      %p441 = scmp.eq.s32.totalorder %s34, 0
      %p442 = por %p440, %p441
      %p443 = scmp.ne.s32.totalorder %s432, %s435
      %p444 = scmp.eq.s32.totalorder %s39, 1
      %p445 = por %p443, %p444
      %p446 = scmp.ne.s32.totalorder %s435, %s436
      %p447 = scmp.eq.s32.totalorder %s39, 0
      %p448 = por %p446, %p447
      %p449 = scmp.ne.s32.totalorder %s435, %s436
      %p450 = scmp.eq.s32.totalorder %s40, 1
      %p451 = por %p449, %p450
      %p453 = scmp.ne.s32.totalorder %s436, %s452
      %p454 = scmp.eq.s32.totalorder %s40, 0
      %p455 = por %p453, %p454
      %p456 = scmp.le.s32.totalorder 1, %s34
      %p457 = scmp.lt.s32.totalorder %s34, 3
      %p458 = pnand %p456, %p457
      %p459 = pneg %p458
      // Predicated region
      $region9: #{tpu_custom_call.1} parent=5 // pred_check
        _
      $region10: #{tpu_custom_call.1} parent=5 // pred_check_branch
        %461 = sbr.rel (%p458) target = $region12
      $region11: #{tpu_custom_call.1} parent=5 // pred_region
        %s462 = ssub.s32 %s34, 1
        // Predicated region
        $region13: #{tpu_custom_call.1} parent=11 // pred_check
          %p463 = pneg %p107
        $region14: #{tpu_custom_call.1} parent=11 // pred_check_branch
          %465 = sbr.rel (%p463) target = $region16
        $region15: #{tpu_custom_call.1} parent=11 // pred_region
          %s467 = ssub.s32 16, 16
          %468 = vsyncadd [#allocation6], %s467
          %s470 = sshll.u32 [#allocation5], 4
          %s471 = int_to_ptr.vmem [resolvable:$true] %s470
          %473 = dma.hbm_to_vmem [thread:$0]  %s2, 16, %s471, [#allocation6]
        $region16: #{tpu_custom_call.1} parent=11 // pred_fallthru
          _
        // Predicated region
        $region17: #{tpu_custom_call.1} parent=11 // pred_check
          %p474 = pneg %p128
        $region18: #{tpu_custom_call.1} parent=11 // pred_check_branch
          %476 = sbr.rel (%p474) target = $region20
        $region19: #{tpu_custom_call.1} parent=11 // pred_region
          %s478 = ssub.s32 16, 16
          %479 = vsyncadd [#allocation6], %s478
          %s481 = sshll.u32 [#allocation7], 4
          %s482 = int_to_ptr.vmem [resolvable:$true] %s481
          %484 = dma.hbm_to_vmem [thread:$0]  %s3, 16, %s482, [#allocation6]
        $region20: #{tpu_custom_call.1} parent=11 // pred_fallthru
          _
        // Predicated region
        $region21: #{tpu_custom_call.1} parent=11 // pred_check
          %p485 = pneg %p149
        $region22: #{tpu_custom_call.1} parent=11 // pred_check_branch
          %487 = sbr.rel (%p485) target = $region24
        $region23: #{tpu_custom_call.1} parent=11 // pred_region
          _
        $region24: #{tpu_custom_call.1} parent=11 // pred_fallthru
          _
        // Predicated region
        $region25: #{tpu_custom_call.1} parent=11 // pred_check
          %p488 = pneg %p170
        $region26: #{tpu_custom_call.1} parent=11 // pred_check_branch
          %490 = sbr.rel (%p488) target = $region28
        $region27: #{tpu_custom_call.1} parent=11 // pred_region
          %s492 = ssub.s32 16, 16
          %493 = vsyncadd [#allocation9], %s492
          %s495 = sshll.u32 [#allocation8], 4
          %s496 = int_to_ptr.vmem [resolvable:$true] %s495
          %498 = dma.hbm_to_vmem [thread:$0]  %s5, 16, %s496, [#allocation9]
        $region28: #{tpu_custom_call.1} parent=11 // pred_fallthru
          _
        // Predicated region
        $region29: #{tpu_custom_call.1} parent=11 // pred_check
          %p499 = pneg %p191
        $region30: #{tpu_custom_call.1} parent=11 // pred_check_branch
          %501 = sbr.rel (%p499) target = $region32
        $region31: #{tpu_custom_call.1} parent=11 // pred_region
          _
        $region32: #{tpu_custom_call.1} parent=11 // pred_fallthru
          _
        // Predicated region
        $region33: #{tpu_custom_call.1} parent=11 // pred_check
          %p502 = pneg %p212
        $region34: #{tpu_custom_call.1} parent=11 // pred_check_branch
          %504 = sbr.rel (%p502) target = $region36
        $region35: #{tpu_custom_call.1} parent=11 // pred_region
          %s506 = ssub.s32 16, 16
          %507 = vsyncadd [#allocation9], %s506
          %s509 = sshll.u32 [#allocation10], 4
          %s510 = int_to_ptr.vmem [resolvable:$true] %s509
          %512 = dma.hbm_to_vmem [thread:$0]  %s7, 16, %s510, [#allocation9]
        $region36: #{tpu_custom_call.1} parent=11 // pred_fallthru
          _
        // Predicated region
        $region37: #{tpu_custom_call.1} parent=11 // pred_check
          %p513 = pneg %p233
        $region38: #{tpu_custom_call.1} parent=11 // pred_check_branch
          %515 = sbr.rel (%p513) target = $region40
        $region39: #{tpu_custom_call.1} parent=11 // pred_region
          %s517 = ssub.s32 256, 256
          %518 = vsyncadd [#allocation12], %s517
          %s519 = sshll.u32 [#allocation11], 4
          %s520 = int_to_ptr.vmem [resolvable:$true] %s519
          %525 = dma.hbm_to_vmem [thread:$0]  %s8, 256, %s520, [#allocation12], 64, 64, 4
        $region40: #{tpu_custom_call.1} parent=11 // pred_fallthru
          _
        // Predicated region
        $region41: #{tpu_custom_call.1} parent=11 // pred_check
          %p526 = pneg %p254
        $region42: #{tpu_custom_call.1} parent=11 // pred_check_branch
          %528 = sbr.rel (%p526) target = $region44
        $region43: #{tpu_custom_call.1} parent=11 // pred_region
          %s530 = ssub.s32 16, 16
          %531 = vsyncadd [#allocation12], %s530
          %s533 = sshll.u32 [#allocation13], 4
          %s534 = int_to_ptr.vmem [resolvable:$true] %s533
          %536 = dma.hbm_to_vmem [thread:$0]  %s9, 16, %s534, [#allocation12]
        $region44: #{tpu_custom_call.1} parent=11 // pred_fallthru
          _
        // Predicated region
        $region45: #{tpu_custom_call.1} parent=11 // pred_check
          %p537 = pneg %p275
        $region46: #{tpu_custom_call.1} parent=11 // pred_check_branch
          %539 = sbr.rel (%p537) target = $region48
        $region47: #{tpu_custom_call.1} parent=11 // pred_region
          _
        $region48: #{tpu_custom_call.1} parent=11 // pred_fallthru
          _
        // Predicated region
        $region49: #{tpu_custom_call.1} parent=11 // pred_check
          %p540 = pneg %p296
        $region50: #{tpu_custom_call.1} parent=11 // pred_check_branch
          %542 = sbr.rel (%p540) target = $region52
        $region51: #{tpu_custom_call.1} parent=11 // pred_region
          _
        $region52: #{tpu_custom_call.1} parent=11 // pred_fallthru
          _
        // Predicated region
        $region53: #{tpu_custom_call.1} parent=11 // pred_check
          %p543 = pneg %p317
        $region54: #{tpu_custom_call.1} parent=11 // pred_check_branch
          %545 = sbr.rel (%p543) target = $region56
        $region55: #{tpu_custom_call.1} parent=11 // pred_region
          _
        $region56: #{tpu_custom_call.1} parent=11 // pred_fallthru
          _
        // Predicated region
        $region57: #{tpu_custom_call.1} parent=11 // pred_check
          %p546 = pneg %p338
        $region58: #{tpu_custom_call.1} parent=11 // pred_check_branch
          %548 = sbr.rel (%p546) target = $region60
        $region59: #{tpu_custom_call.1} parent=11 // pred_region
          _
        $region60: #{tpu_custom_call.1} parent=11 // pred_fallthru
          _
        // Predicated region
        $region61: #{tpu_custom_call.1} parent=11 // pred_check
          %p549 = pneg %p359
        $region62: #{tpu_custom_call.1} parent=11 // pred_check_branch
          %551 = sbr.rel (%p549) target = $region64
        $region63: #{tpu_custom_call.1} parent=11 // pred_region
          %s553 = ssub.s32 256, 256
          %554 = vsyncadd [#allocation15], %s553
          %s555 = sshll.u32 [#allocation14], 4
          %s556 = int_to_ptr.vmem [resolvable:$true] %s555
          %561 = dma.hbm_to_vmem [thread:$0]  %s14, 256, %s556, [#allocation15], 64, 64, 4
        $region64: #{tpu_custom_call.1} parent=11 // pred_fallthru
          _
        // Predicated region
        $region65: #{tpu_custom_call.1} parent=11 // pred_check
          %p562 = pneg %p380
        $region66: #{tpu_custom_call.1} parent=11 // pred_check_branch
          %564 = sbr.rel (%p562) target = $region68
        $region67: #{tpu_custom_call.1} parent=11 // pred_region
          _
        $region68: #{tpu_custom_call.1} parent=11 // pred_fallthru
          _
        // Predicated region
        $region69: #{tpu_custom_call.1} parent=11 // pred_check
          %p565 = pneg %p401
        $region70: #{tpu_custom_call.1} parent=11 // pred_check_branch
          %567 = sbr.rel (%p565) target = $region72
        $region71: #{tpu_custom_call.1} parent=11 // pred_region
          _
        $region72: #{tpu_custom_call.1} parent=11 // pred_fallthru
          _
        // Predicated region
        $region73: #{tpu_custom_call.1} parent=11 // pred_check
          %p568 = pneg %p422
        $region74: #{tpu_custom_call.1} parent=11 // pred_check_branch
          %570 = sbr.rel (%p568) target = $region76
        $region75: #{tpu_custom_call.1} parent=11 // pred_region
          _
        $region76: #{tpu_custom_call.1} parent=11 // pred_fallthru
          _
      $region12: #{tpu_custom_call.1} parent=5 // pred_fallthru
        _
      %p571 = scmp.lt.s32.totalorder %s34, 2
      // Predicated region
      $region77: #{tpu_custom_call.1} parent=5 // pred_check
        %p572 = pneg %p571
      $region78: #{tpu_custom_call.1} parent=5 // pred_check_branch
        %574 = sbr.rel (%p572) target = $region80
      $region79: #{tpu_custom_call.1} parent=5 // pred_region
        // Predicated region
        $region81: #{tpu_custom_call.1} parent=79 // pred_check
          %p575 = pneg %p54
        $region82: #{tpu_custom_call.1} parent=79 // pred_check_branch
          %577 = sbr.rel (%p575) target = $region84
        $region83: #{tpu_custom_call.1} parent=79 // pred_region
          %p578 = scmp.lt.s32.totalorder %s34, 1
          %s579 = scalar_select %p578, %s34, 1
          %s580 = smul.addr %s579, 8
          %s581 = scalar_lea.vmem %s0, %s580
        $region84: #{tpu_custom_call.1} parent=79 // pred_fallthru
          _
        // Predicated region
        $region85: #{tpu_custom_call.1} parent=79 // pred_check
          %p582 = pneg %p80
        $region86: #{tpu_custom_call.1} parent=79 // pred_check_branch
          %584 = sbr.rel (%p582) target = $region88
        $region87: #{tpu_custom_call.1} parent=79 // pred_region
          %s585 = sand.u32 %s70, 1
          %s586 = scalar_lea.sflag [#allocation3], %s585
          %s587 = sand.u32 %s70, 1
          %s588 = smul.addr %s587, 32
          %s589 = scalar_lea.vmem [#allocation2], %s588
          %s591 = ssub.s32 512, 512
          %592 = vsyncadd %s586, %s591
          %s593 = smul.addr %s34, 4
          %s594 = smul.addr %s593, 128
          %s595 = scalar_lea.hbm %s1, %s594
          %s596 = sshll.u32 %s589, 4
          %s597 = int_to_ptr.vmem [resolvable:$true] %s596
          %602 = dma.hbm_to_vmem [thread:$0]  %s595, 512, %s597, %s586, 128, 128, 8
        $region88: #{tpu_custom_call.1} parent=79 // pred_fallthru
          _
      $region80: #{tpu_custom_call.1} parent=5 // pred_fallthru
        _
      %p603 = scmp.le.s32.totalorder 1, %s34
      %p604 = scmp.lt.s32.totalorder %s34, 3
      %p605 = pnand %p603, %p604
      %p606 = pneg %p605
      // Predicated region
      $region89: #{tpu_custom_call.1} parent=5 // pred_check
        _
      $region90: #{tpu_custom_call.1} parent=5 // pred_check_branch
        %608 = sbr.rel (%p605) target = $region92
      $region91: #{tpu_custom_call.1} parent=5 // pred_region
        %s609 = ssub.s32 %s34, 1
        %s610 = sand.u32 %s73, 1
        %s611 = scalar_lea.sflag [#allocation3], %s610
        %s612 = sand.u32 %s73, 1
        %s613 = smul.addr %s612, 32
        %s614 = scalar_lea.vmem [#allocation2], %s613
        // Predicated region
        $region93: #{tpu_custom_call.1} parent=91 // pred_check
          %p615 = pneg %p86
        $region94: #{tpu_custom_call.1} parent=91 // pred_check_branch
          %617 = sbr.rel (%p615) target = $region96
        $region95: #{tpu_custom_call.1} parent=91 // pred_region
          %618 = dma.done %s611, 512
        $region96: #{tpu_custom_call.1} parent=91 // pred_fallthru
          _
        // Predicated region
        $region97: #{tpu_custom_call.1} parent=91 // pred_check
          %p619 = pneg %p107
        $region98: #{tpu_custom_call.1} parent=91 // pred_check_branch
          %621 = sbr.rel (%p619) target = $region100
        $region99: #{tpu_custom_call.1} parent=91 // pred_region
          %622 = dma.done [#allocation6], 16
        $region100: #{tpu_custom_call.1} parent=91 // pred_fallthru
          _
        // Predicated region
        $region101: #{tpu_custom_call.1} parent=91 // pred_check
          %p623 = pneg %p128
        $region102: #{tpu_custom_call.1} parent=91 // pred_check_branch
          %625 = sbr.rel (%p623) target = $region104
        $region103: #{tpu_custom_call.1} parent=91 // pred_region
          %626 = dma.done [#allocation6], 16
        $region104: #{tpu_custom_call.1} parent=91 // pred_fallthru
          _
        // Predicated region
        $region105: #{tpu_custom_call.1} parent=91 // pred_check
          %p627 = pneg %p170
        $region106: #{tpu_custom_call.1} parent=91 // pred_check_branch
          %629 = sbr.rel (%p627) target = $region108
        $region107: #{tpu_custom_call.1} parent=91 // pred_region
          %630 = dma.done [#allocation9], 16
        $region108: #{tpu_custom_call.1} parent=91 // pred_fallthru
          _
        // Predicated region
        $region109: #{tpu_custom_call.1} parent=91 // pred_check
          %p631 = pneg %p212
        $region110: #{tpu_custom_call.1} parent=91 // pred_check_branch
          %633 = sbr.rel (%p631) target = $region112
        $region111: #{tpu_custom_call.1} parent=91 // pred_region
          %634 = dma.done [#allocation9], 16
        $region112: #{tpu_custom_call.1} parent=91 // pred_fallthru
          _
        // Predicated region
        $region113: #{tpu_custom_call.1} parent=91 // pred_check
          %p635 = pneg %p233
        $region114: #{tpu_custom_call.1} parent=91 // pred_check_branch
          %637 = sbr.rel (%p635) target = $region116
        $region115: #{tpu_custom_call.1} parent=91 // pred_region
          %638 = dma.done [#allocation12], 256
        $region116: #{tpu_custom_call.1} parent=91 // pred_fallthru
          _
        // Predicated region
        $region117: #{tpu_custom_call.1} parent=91 // pred_check
          %p639 = pneg %p254
        $region118: #{tpu_custom_call.1} parent=91 // pred_check_branch
          %641 = sbr.rel (%p639) target = $region120
        $region119: #{tpu_custom_call.1} parent=91 // pred_region
          %642 = dma.done [#allocation12], 16
        $region120: #{tpu_custom_call.1} parent=91 // pred_fallthru
          _
        // Predicated region
        $region121: #{tpu_custom_call.1} parent=91 // pred_check
          %p643 = pneg %p359
        $region122: #{tpu_custom_call.1} parent=91 // pred_check_branch
          %645 = sbr.rel (%p643) target = $region124
        $region123: #{tpu_custom_call.1} parent=91 // pred_region
          %646 = dma.done [#allocation15], 256
        $region124: #{tpu_custom_call.1} parent=91 // pred_fallthru
          _
        %p647 = scmp.lt.s32.totalorder %s39, 1
        %s648 = scalar_select %p647, %s39, 1
        %s649 = smul.addr %s648, 8
        %s650 = scalar_lea.vmem %s0, %s649
        %p651 = pneg %p60
        %p652 = pneg %p57
        %s653 = sand.u32 %s73, 1
        %s654 = scalar_lea.sflag [#allocation3], %s653
        %s655 = sand.u32 %s73, 1
        %s656 = smul.addr %s655, 32
        %s657 = scalar_lea.vmem [#allocation2], %s656
        %p658 = pneg %p86
        %p659 = pneg %p83
        %p660 = pneg %p107
        %p661 = pneg %p104
        %p662 = pneg %p128
        %p663 = pneg %p125
        %p664 = pneg %p149
        %p665 = pneg %p146
        %p666 = pneg %p170
        %p667 = pneg %p167
        %p668 = pneg %p191
        %p669 = pneg %p188
        %p670 = pneg %p212
        %p671 = pneg %p209
        %p672 = pneg %p233
        %p673 = pneg %p230
        %p674 = pneg %p254
        %p675 = pneg %p251
        %p676 = pneg %p275
        %p677 = pneg %p272
        %p678 = pneg %p296
        %p679 = pneg %p293
        %p680 = pneg %p317
        %p681 = pneg %p314
        %p682 = pneg %p338
        %p683 = pneg %p335
        %p684 = pneg %p359
        %p685 = pneg %p356
        %p686 = pneg %p380
        %p687 = pneg %p377
        %p688 = pneg %p401
        %p689 = pneg %p398
        %p690 = pneg %p422
        %p691 = pneg %p419
        %p692 = pneg %p448
        %p693 = pneg %p445
        %s694 = sand.u32 %s435, 1
        %s695 = scalar_lea.sflag [#allocation4], %s694
        %s696 = sand.u32 %s435, 1
        %s697 = smul.addr %s696, 8
        %s698 = scalar_lea.vmem [#allocation16], %s697
        %p699 = scmp.lt.s32.totalorder %s39, 1
        %s700 = scalar_select %p699, %s39, 1
        %s701 = smul.addr %s700, 8
        %s702 = scalar_lea.vmem %s0, %s701
        %v704 = vld [vmem:[%s702] sm:$0xff]
        %v705 = vld [vmem:[#allocation5] sm:$0x1]
        %v706 = vld [vmem:[#allocation7] sm:$0x1]
        %vm707 = vcmask 261120
        %v708 = vsel %vm707, %v704, 0.0
        %709 = vadd.xlane.f32.xlu0 %v708
        %v710 = vpop.xlane.xlu0 %709
        %v711 = vrcp.pop 32.0
        %v712 = vmul.f32 %v710, %v711
        %v713 = vsub.f32 %v704, %v712
        %v714 = vmul.f32 %v713, %v713
        %v715 = vsel %vm707, %v714, 0.0
        %716 = vadd.xlane.f32.xlu0 %v715
        %v717 = vpop.xlane.xlu0 %716
        %v718 = vmul.f32 %v717, %v711
        %v719 = vadd.f32 %v718, 1e-05
        %v720 = vrsqrt.pop %v719
        %v721 = vmul.f32 %v713, %v720
        %v723 = vlaneseq
        %v724 = vshrl.u32 %v723, 7
        %v725 = vsub.s32 0, %v724
        %v726 = vrot.slane %v705, %v725
        %v728 = vmul.f32 %v721, %v726
        %v730 = vlaneseq
        %v731 = vshrl.u32 %v730, 7
        %v732 = vsub.s32 0, %v731
        %v733 = vrot.slane %v706, %v732
        %v735 = vadd.f32 %v728, %v733
        %v736 = vpack.c.bf16 %v735, %v735
        %v737 = vld [vmem:[%s4] sm:$0xf]
        %v738 = vld [vmem:[%s4 + $0x4] sm:$0xf]
        %v739 = vld [vmem:[%s4 + $0x8] sm:$0xf]
        %v740 = vld [vmem:[%s4 + $0xc] sm:$0xf]
        %v741 = vld [vmem:[#allocation8] sm:$0x1]
        %v743 = vlaneseq
        %v744 = vshrl.u32 %v743, 7
        %v745 = vsub.s32 0, %v744
        %v746 = vrot.slane %v741, %v745
        %v752 = vunpack.c.l.b16 %v737
        %v753 = vunpack.c.l.b16 %v738
        %v754 = vunpack.c.l.b16 %v739
        %v755 = vunpack.c.l.b16 %v740
        %v756 = vpack.c.b16 %v753, %v752
        %v757 = vpack.c.b16 %v755, %v754
        %v761 = vsel %vm707, %v736, 0
        %763 = vmatprep.subr.bf16.mxu0 0
        %764 = vmatpush1.bf16.msra.mxu0 0
        %765 = vmatprep.subr.bf16.mxu0 0
        %766 = vmatpush1.bf16.msra.mxu0 0
        %767 = vmatprep.subr.bf16.mxu0 0
        %768 = vmatpush1.bf16.msra.mxu0 0
        %769 = vmatprep.subr.bf16.mxu0 0
        %770 = vmatpush1.bf16.msra.mxu0 0
        %771 = vmatprep.subr.bf16.mxu0 0
        %772 = vmatpush1.bf16.msra.mxu0 0
        %773 = vmatprep.subr.bf16.mxu0 0
        %774 = vmatpush1.bf16.msra.mxu0 0
        %775 = vmatprep.subr.bf16.mxu0 0
        %776 = vmatpush1.bf16.msra.mxu0 %v757
        %777 = vmatprep.subr.bf16.mxu0 0
        %778 = vmatpush1.bf16.msra.mxu0 %v756
        %779 = vmatprep.subr.bf16.mxu0 0
        %780 = vmatpush2.bf16.msra.mxu0 0
        %781 = vmatprep.subr.bf16.mxu0 0
        %782 = vmatpush2.bf16.msra.mxu0 0
        %783 = vmatprep.subr.bf16.mxu0 0
        %784 = vmatpush2.bf16.msra.mxu0 0
        %785 = vmatprep.subr.bf16.mxu0 0
        %786 = vmatpush2.bf16.msra.mxu0 0
        %787 = vmatprep.subr.bf16.mxu0 0
        %788 = vmatpush2.bf16.msra.mxu0 0
        %789 = vmatprep.subr.bf16.mxu0 0
        %790 = vmatpush2.bf16.msra.mxu0 0
        %791 = vmatprep.subr.bf16.mxu0 0
        %792 = vmatpush2.bf16.msra.mxu0 0
        %793 = vmatprep.subr.bf16.mxu0 0
        %794 = vmatpush2.bf16.msra.mxu0 0
        %795 = vmatprep.mubr.bf16.mxu0 0
        %796 = vmatmul.mubr.bf16.gmra.mxu0 %v761
        %v797 = vpop.f32.mrf.mxu0
        %v798 = vadd.f32 %v746, %v797
        %v799 = vpop.f32.mrf.mxu0
        %v800 = vpop.f32.mrf.mxu0
        %v801 = vpop.f32.mrf.mxu0
        %802 = vdwg.mxu0
        %v803 = vld [vmem:[%s6] sm:$0xf]
        %v804 = vld [vmem:[%s6 + $0x4] sm:$0xf]
        %v805 = vld [vmem:[%s6 + $0x8] sm:$0xf]
        %v806 = vld [vmem:[%s6 + $0xc] sm:$0xf]
        %v807 = vld [vmem:[#allocation10] sm:$0x1]
        %v809 = vlaneseq
        %v810 = vshrl.u32 %v809, 7
        %v811 = vsub.s32 0, %v810
        %v812 = vrot.slane %v807, %v811
        %v818 = vunpack.c.l.b16 %v803
        %v819 = vunpack.c.l.b16 %v804
        %v820 = vunpack.c.l.b16 %v805
        %v821 = vunpack.c.l.b16 %v806
        %v822 = vpack.c.b16 %v819, %v818
        %v823 = vpack.c.b16 %v821, %v820
        %826 = vmatprep.subr.bf16.mxu0 0
        %827 = vmatpush1.bf16.msra.mxu0 0
        %828 = vmatprep.subr.bf16.mxu0 0
        %829 = vmatpush1.bf16.msra.mxu0 0
        %830 = vmatprep.subr.bf16.mxu0 0
        %831 = vmatpush1.bf16.msra.mxu0 0
        %832 = vmatprep.subr.bf16.mxu0 0
        %833 = vmatpush1.bf16.msra.mxu0 0
        %834 = vmatprep.subr.bf16.mxu0 0
        %835 = vmatpush1.bf16.msra.mxu0 0
        %836 = vmatprep.subr.bf16.mxu0 0
        %837 = vmatpush1.bf16.msra.mxu0 0
        %838 = vmatprep.subr.bf16.mxu0 0
        %839 = vmatpush1.bf16.msra.mxu0 %v823
        %840 = vmatprep.subr.bf16.mxu0 0
        %841 = vmatpush1.bf16.msra.mxu0 %v822
        %842 = vmatprep.subr.bf16.mxu0 0
        %843 = vmatpush2.bf16.msra.mxu0 0
        %844 = vmatprep.subr.bf16.mxu0 0
        %845 = vmatpush2.bf16.msra.mxu0 0
        %846 = vmatprep.subr.bf16.mxu0 0
        %847 = vmatpush2.bf16.msra.mxu0 0
        %848 = vmatprep.subr.bf16.mxu0 0
        %849 = vmatpush2.bf16.msra.mxu0 0
        %850 = vmatprep.subr.bf16.mxu0 0
        %851 = vmatpush2.bf16.msra.mxu0 0
        %852 = vmatprep.subr.bf16.mxu0 0
        %853 = vmatpush2.bf16.msra.mxu0 0
        %854 = vmatprep.subr.bf16.mxu0 0
        %855 = vmatpush2.bf16.msra.mxu0 0
        %856 = vmatprep.subr.bf16.mxu0 0
        %857 = vmatpush2.bf16.msra.mxu0 0
        %858 = vmatprep.mubr.bf16.mxu0 0
        %859 = vmatmul.mubr.bf16.gmra.mxu0 %v761
        %v860 = vpop.f32.mrf.mxu0
        %v861 = vadd.f32 %v812, %v860
        %v862 = vpop.f32.mrf.mxu0
        %v863 = vpop.f32.mrf.mxu0
        %v864 = vpop.f32.mrf.mxu0
        %865 = vdwg.mxu0
        %v866 = vld [vmem:[#allocation11] sm:$0xf]
        %v867 = vld [vmem:[#allocation11 + $0x4] sm:$0xf]
        %v868 = vld [vmem:[#allocation11 + $0x8] sm:$0xf]
        %v869 = vld [vmem:[#allocation11 + $0xc] sm:$0xf]
        %v870 = vld [vmem:[#allocation13] sm:$0x1]
        %v872 = vlaneseq
        %v873 = vshrl.u32 %v872, 7
        %v874 = vsub.s32 0, %v873
        %v875 = vrot.slane %v870, %v874
        %v881 = vunpack.c.l.b16 %v866
        %v882 = vunpack.c.l.b16 %v867
        %v883 = vunpack.c.l.b16 %v868
        %v884 = vunpack.c.l.b16 %v869
        %v885 = vpack.c.b16 %v882, %v881
        %v886 = vpack.c.b16 %v884, %v883
        %889 = vmatprep.subr.bf16.mxu0 0
        %890 = vmatpush1.bf16.msra.mxu0 0
        %891 = vmatprep.subr.bf16.mxu0 0
        %892 = vmatpush1.bf16.msra.mxu0 0
        %893 = vmatprep.subr.bf16.mxu0 0
        %894 = vmatpush1.bf16.msra.mxu0 0
        %895 = vmatprep.subr.bf16.mxu0 0
        %896 = vmatpush1.bf16.msra.mxu0 0
        %897 = vmatprep.subr.bf16.mxu0 0
        %898 = vmatpush1.bf16.msra.mxu0 0
        %899 = vmatprep.subr.bf16.mxu0 0
        %900 = vmatpush1.bf16.msra.mxu0 0
        %901 = vmatprep.subr.bf16.mxu0 0
        %902 = vmatpush1.bf16.msra.mxu0 %v886
        %903 = vmatprep.subr.bf16.mxu0 0
        %904 = vmatpush1.bf16.msra.mxu0 %v885
        %905 = vmatprep.subr.bf16.mxu0 0
        %906 = vmatpush2.bf16.msra.mxu0 0
        %907 = vmatprep.subr.bf16.mxu0 0
        %908 = vmatpush2.bf16.msra.mxu0 0
        %909 = vmatprep.subr.bf16.mxu0 0
        %910 = vmatpush2.bf16.msra.mxu0 0
        %911 = vmatprep.subr.bf16.mxu0 0
        %912 = vmatpush2.bf16.msra.mxu0 0
        %913 = vmatprep.subr.bf16.mxu0 0
        %914 = vmatpush2.bf16.msra.mxu0 0
        %915 = vmatprep.subr.bf16.mxu0 0
        %916 = vmatpush2.bf16.msra.mxu0 0
        %917 = vmatprep.subr.bf16.mxu0 0
        %918 = vmatpush2.bf16.msra.mxu0 0
        %919 = vmatprep.subr.bf16.mxu0 0
        %920 = vmatpush2.bf16.msra.mxu0 0
        %921 = vmatprep.mubr.bf16.mxu0 0
        %922 = vmatmul.mubr.bf16.gmra.mxu0 %v761
        %v923 = vpop.f32.mrf.mxu0
        %v924 = vadd.f32 %v875, %v923
        %v925 = vpop.f32.mrf.mxu0
        %v926 = vpop.f32.mrf.mxu0
        %v927 = vpop.f32.mrf.mxu0
        %928 = vdwg.mxu0
        %v929 = vmul.f32 %v798, 0.35355338
        %931 = vrot.lane.b32.xlu0 %v929, 120
        %v932 = vpop.permute.xlu0 %931
        %934 = vrot.lane.b32.xlu0 %v929, 112
        %v935 = vpop.permute.xlu0 %934
        %937 = vrot.lane.b32.xlu0 %v929, 104
        %v938 = vpop.permute.xlu0 %937
        %v940 = vcombine.low %v929, %v935
        %v941 = vcombine.high %v929, %v935
        %v943 = vunpack.c.l.s4 1983009808
        %v944 = vunpack.c.0.s8 %v943
        %v945 = vlaneseq
        %v946 = vshrl.u32 %v945, 7
        %v947 = vsub.s32 %v944, %v946
        %v948 = vrot.slane %v940, %v947
        %v950 = vunpack.c.l.s4 1983009808
        %v951 = vunpack.c.0.s8 %v950
        %v952 = vlaneseq
        %v953 = vshrl.u32 %v952, 7
        %v954 = vsub.s32 %v951, %v953
        %v955 = vrot.slane %v941, %v954
        %v956 = vcombine.low %v932, %v938
        %v957 = vcombine.high %v932, %v938
        %v959 = vunpack.c.l.s4 1983009808
        %v960 = vunpack.c.0.s8 %v959
        %v961 = vlaneseq
        %v962 = vshrl.u32 %v961, 7
        %v963 = vsub.s32 %v960, %v962
        %v964 = vrot.slane %v956, %v963
        %v966 = vunpack.c.l.s4 1983009808
        %v967 = vunpack.c.0.s8 %v966
        %v968 = vlaneseq
        %v969 = vshrl.u32 %v968, 7
        %v970 = vsub.s32 %v967, %v969
        %v971 = vrot.slane %v957, %v970
        %v972 = vcombine.low %v948, %v964
        %v973 = vcombine.high %v948, %v964
        %v975 = vunpack.c.l.s4 1934713408
        %v976 = vunpack.c.0.s8 %v975
        %v977 = vlaneseq
        %v978 = vshrl.u32 %v977, 7
        %v979 = vsub.s32 %v976, %v978
        %v980 = vrot.slane %v972, %v979
        %v982 = vunpack.c.l.s4 1934713408
        %v983 = vunpack.c.0.s8 %v982
        %v984 = vlaneseq
        %v985 = vshrl.u32 %v984, 7
        %v986 = vsub.s32 %v983, %v985
        %v987 = vrot.slane %v973, %v986
        %v988 = vcombine.low %v955, %v971
        %v989 = vcombine.high %v955, %v971
        %v991 = vunpack.c.l.s4 1934713408
        %v992 = vunpack.c.0.s8 %v991
        %v993 = vlaneseq
        %v994 = vshrl.u32 %v993, 7
        %v995 = vsub.s32 %v992, %v994
        %v996 = vrot.slane %v988, %v995
        %v998 = vunpack.c.l.s4 1934713408
        %v999 = vunpack.c.0.s8 %v998
        %v1000 = vlaneseq
        %v1001 = vshrl.u32 %v1000, 7
        %v1002 = vsub.s32 %v999, %v1001
        %v1003 = vrot.slane %v989, %v1002
        %v1004 = vcombine.high %v980, 0.0
        %v1005 = vcombine.high %v987, 0.0
        %v1006 = vcombine.high %v996, 0.0
        %v1007 = vcombine.high %v1003, 0.0
        %v1008 = vcombine.low %v980, %v987
        %v1010 = vunpack.c.l.s4 1983009808
        %v1011 = vunpack.c.0.s8 %v1010
        %v1012 = vlaneseq
        %v1013 = vshrl.u32 %v1012, 7
        %v1014 = vsub.s32 %v1011, %v1013
        %v1015 = vrot.slane %v1008, %v1014
        %v1016 = vcombine.low %v1004, %v1005
        %v1018 = vunpack.c.l.s4 1983009808
        %v1019 = vunpack.c.0.s8 %v1018
        %v1020 = vlaneseq
        %v1021 = vshrl.u32 %v1020, 7
        %v1022 = vsub.s32 %v1019, %v1021
        %v1023 = vrot.slane %v1016, %v1022
        %v1024 = vcombine.low %v996, %v1003
        %v1026 = vunpack.c.l.s4 1983009808
        %v1027 = vunpack.c.0.s8 %v1026
        %v1028 = vlaneseq
        %v1029 = vshrl.u32 %v1028, 7
        %v1030 = vsub.s32 %v1027, %v1029
        %v1031 = vrot.slane %v1024, %v1030
        %v1032 = vcombine.low %v1006, %v1007
        %v1034 = vunpack.c.l.s4 1983009808
        %v1035 = vunpack.c.0.s8 %v1034
        %v1036 = vlaneseq
        %v1037 = vshrl.u32 %v1036, 7
        %v1038 = vsub.s32 %v1035, %v1037
        %v1039 = vrot.slane %v1032, %v1038
        %v1040 = vcombine.low %v1015, %v1023
        %v1041 = vcombine.high %v1015, %v1023
        %v1043 = vunpack.c.l.s4 1934713408
        %v1044 = vunpack.c.0.s8 %v1043
        %v1045 = vlaneseq
        %v1046 = vshrl.u32 %v1045, 7
        %v1047 = vsub.s32 %v1044, %v1046
        %v1048 = vrot.slane %v1040, %v1047
        %v1050 = vunpack.c.l.s4 1934713408
        %v1051 = vunpack.c.0.s8 %v1050
        %v1052 = vlaneseq
        %v1053 = vshrl.u32 %v1052, 7
        %v1054 = vsub.s32 %v1051, %v1053
        %v1055 = vrot.slane %v1041, %v1054
        %v1056 = vcombine.low %v1031, %v1039
        %v1057 = vcombine.high %v1031, %v1039
        %v1059 = vunpack.c.l.s4 1934713408
        %v1060 = vunpack.c.0.s8 %v1059
        %v1061 = vlaneseq
        %v1062 = vshrl.u32 %v1061, 7
        %v1063 = vsub.s32 %v1060, %v1062
        %v1064 = vrot.slane %v1056, %v1063
        %v1066 = vunpack.c.l.s4 1934713408
        %v1067 = vunpack.c.0.s8 %v1066
        %v1068 = vlaneseq
        %v1069 = vshrl.u32 %v1068, 7
        %v1070 = vsub.s32 %v1067, %v1069
        %v1071 = vrot.slane %v1057, %v1070
        %v1072 = vcombine.low %v1048, %v1064
        %v1073 = vcombine.high %v1048, %v1064
        %v1074 = vcombine.low %v1055, %v1071
        %v1075 = vcombine.high %v1055, %v1071
        %v1076 = vpack.c.bf16 %v1072, %v1072
        %v1077 = vpack.c.bf16 %v1073, %v1073
        %v1078 = vpack.c.bf16 %v1074, %v1074
        %v1079 = vpack.c.bf16 %v1075, %v1075
        %1081 = vrot.lane.b32.xlu0 %v861, 120
        %v1082 = vpop.permute.xlu0 %1081
        %1084 = vrot.lane.b32.xlu0 %v861, 112
        %v1085 = vpop.permute.xlu0 %1084
        %1087 = vrot.lane.b32.xlu0 %v861, 104
        %v1088 = vpop.permute.xlu0 %1087
        %v1090 = vcombine.low %v861, %v1085
        %v1091 = vcombine.high %v861, %v1085
        %v1093 = vunpack.c.l.s4 1983009808
        %v1094 = vunpack.c.0.s8 %v1093
        %v1095 = vlaneseq
        %v1096 = vshrl.u32 %v1095, 7
        %v1097 = vsub.s32 %v1094, %v1096
        %v1098 = vrot.slane %v1090, %v1097
        %v1100 = vunpack.c.l.s4 1983009808
        %v1101 = vunpack.c.0.s8 %v1100
        %v1102 = vlaneseq
        %v1103 = vshrl.u32 %v1102, 7
        %v1104 = vsub.s32 %v1101, %v1103
        %v1105 = vrot.slane %v1091, %v1104
        %v1106 = vcombine.low %v1082, %v1088
        %v1107 = vcombine.high %v1082, %v1088
        %v1109 = vunpack.c.l.s4 1983009808
        %v1110 = vunpack.c.0.s8 %v1109
        %v1111 = vlaneseq
        %v1112 = vshrl.u32 %v1111, 7
        %v1113 = vsub.s32 %v1110, %v1112
        %v1114 = vrot.slane %v1106, %v1113
        %v1116 = vunpack.c.l.s4 1983009808
        %v1117 = vunpack.c.0.s8 %v1116
        %v1118 = vlaneseq
        %v1119 = vshrl.u32 %v1118, 7
        %v1120 = vsub.s32 %v1117, %v1119
        %v1121 = vrot.slane %v1107, %v1120
        %v1122 = vcombine.low %v1098, %v1114
        %v1123 = vcombine.high %v1098, %v1114
        %v1125 = vunpack.c.l.s4 1934713408
        %v1126 = vunpack.c.0.s8 %v1125
        %v1127 = vlaneseq
        %v1128 = vshrl.u32 %v1127, 7
        %v1129 = vsub.s32 %v1126, %v1128
        %v1130 = vrot.slane %v1122, %v1129
        %v1132 = vunpack.c.l.s4 1934713408
        %v1133 = vunpack.c.0.s8 %v1132
        %v1134 = vlaneseq
        %v1135 = vshrl.u32 %v1134, 7
        %v1136 = vsub.s32 %v1133, %v1135
        %v1137 = vrot.slane %v1123, %v1136
        %v1138 = vcombine.low %v1105, %v1121
        %v1139 = vcombine.high %v1105, %v1121
        %v1141 = vunpack.c.l.s4 1934713408
        %v1142 = vunpack.c.0.s8 %v1141
        %v1143 = vlaneseq
        %v1144 = vshrl.u32 %v1143, 7
        %v1145 = vsub.s32 %v1142, %v1144
        %v1146 = vrot.slane %v1138, %v1145
        %v1148 = vunpack.c.l.s4 1934713408
        %v1149 = vunpack.c.0.s8 %v1148
        %v1150 = vlaneseq
        %v1151 = vshrl.u32 %v1150, 7
        %v1152 = vsub.s32 %v1149, %v1151
        %v1153 = vrot.slane %v1139, %v1152
        %v1154 = vcombine.high %v1130, 0.0
        %v1155 = vcombine.high %v1137, 0.0
        %v1156 = vcombine.high %v1146, 0.0
        %v1157 = vcombine.high %v1153, 0.0
        %v1158 = vcombine.low %v1130, %v1137
        %v1160 = vunpack.c.l.s4 1983009808
        %v1161 = vunpack.c.0.s8 %v1160
        %v1162 = vlaneseq
        %v1163 = vshrl.u32 %v1162, 7
        %v1164 = vsub.s32 %v1161, %v1163
        %v1165 = vrot.slane %v1158, %v1164
        %v1166 = vcombine.low %v1154, %v1155
        %v1168 = vunpack.c.l.s4 1983009808
        %v1169 = vunpack.c.0.s8 %v1168
        %v1170 = vlaneseq
        %v1171 = vshrl.u32 %v1170, 7
        %v1172 = vsub.s32 %v1169, %v1171
        %v1173 = vrot.slane %v1166, %v1172
        %v1174 = vcombine.low %v1146, %v1153
        %v1176 = vunpack.c.l.s4 1983009808
        %v1177 = vunpack.c.0.s8 %v1176
        %v1178 = vlaneseq
        %v1179 = vshrl.u32 %v1178, 7
        %v1180 = vsub.s32 %v1177, %v1179
        %v1181 = vrot.slane %v1174, %v1180
        %v1182 = vcombine.low %v1156, %v1157
        %v1184 = vunpack.c.l.s4 1983009808
        %v1185 = vunpack.c.0.s8 %v1184
        %v1186 = vlaneseq
        %v1187 = vshrl.u32 %v1186, 7
        %v1188 = vsub.s32 %v1185, %v1187
        %v1189 = vrot.slane %v1182, %v1188
        %v1190 = vcombine.low %v1165, %v1173
        %v1191 = vcombine.high %v1165, %v1173
        %v1193 = vunpack.c.l.s4 1934713408
        %v1194 = vunpack.c.0.s8 %v1193
        %v1195 = vlaneseq
        %v1196 = vshrl.u32 %v1195, 7
        %v1197 = vsub.s32 %v1194, %v1196
        %v1198 = vrot.slane %v1190, %v1197
        %v1200 = vunpack.c.l.s4 1934713408
        %v1201 = vunpack.c.0.s8 %v1200
        %v1202 = vlaneseq
        %v1203 = vshrl.u32 %v1202, 7
        %v1204 = vsub.s32 %v1201, %v1203
        %v1205 = vrot.slane %v1191, %v1204
        %v1206 = vcombine.low %v1181, %v1189
        %v1207 = vcombine.high %v1181, %v1189
        %v1209 = vunpack.c.l.s4 1934713408
        %v1210 = vunpack.c.0.s8 %v1209
        %v1211 = vlaneseq
        %v1212 = vshrl.u32 %v1211, 7
        %v1213 = vsub.s32 %v1210, %v1212
        %v1214 = vrot.slane %v1206, %v1213
        %v1216 = vunpack.c.l.s4 1934713408
        %v1217 = vunpack.c.0.s8 %v1216
        %v1218 = vlaneseq
        %v1219 = vshrl.u32 %v1218, 7
        %v1220 = vsub.s32 %v1217, %v1219
        %v1221 = vrot.slane %v1207, %v1220
        %v1222 = vcombine.low %v1198, %v1214
        %v1223 = vcombine.high %v1198, %v1214
        %v1224 = vcombine.low %v1205, %v1221
        %v1225 = vcombine.high %v1205, %v1221
        %v1226 = vpack.c.bf16 %v1222, %v1222
        %v1227 = vpack.c.bf16 %v1223, %v1223
        %v1228 = vpack.c.bf16 %v1224, %v1224
        %v1229 = vpack.c.bf16 %v1225, %v1225
        %1231 = vrot.lane.b32.xlu0 %v924, 120
        %v1232 = vpop.permute.xlu0 %1231
        %1234 = vrot.lane.b32.xlu0 %v924, 112
        %v1235 = vpop.permute.xlu0 %1234
        %1237 = vrot.lane.b32.xlu0 %v924, 104
        %v1238 = vpop.permute.xlu0 %1237
        %v1240 = vcombine.low %v924, %v1235
        %v1241 = vcombine.high %v924, %v1235
        %v1243 = vunpack.c.l.s4 1983009808
        %v1244 = vunpack.c.0.s8 %v1243
        %v1245 = vlaneseq
        %v1246 = vshrl.u32 %v1245, 7
        %v1247 = vsub.s32 %v1244, %v1246
        %v1248 = vrot.slane %v1240, %v1247
        %v1250 = vunpack.c.l.s4 1983009808
        %v1251 = vunpack.c.0.s8 %v1250
        %v1252 = vlaneseq
        %v1253 = vshrl.u32 %v1252, 7
        %v1254 = vsub.s32 %v1251, %v1253
        %v1255 = vrot.slane %v1241, %v1254
        %v1256 = vcombine.low %v1232, %v1238
        %v1257 = vcombine.high %v1232, %v1238
        %v1259 = vunpack.c.l.s4 1983009808
        %v1260 = vunpack.c.0.s8 %v1259
        %v1261 = vlaneseq
        %v1262 = vshrl.u32 %v1261, 7
        %v1263 = vsub.s32 %v1260, %v1262
        %v1264 = vrot.slane %v1256, %v1263
        %v1266 = vunpack.c.l.s4 1983009808
        %v1267 = vunpack.c.0.s8 %v1266
        %v1268 = vlaneseq
        %v1269 = vshrl.u32 %v1268, 7
        %v1270 = vsub.s32 %v1267, %v1269
        %v1271 = vrot.slane %v1257, %v1270
        %v1272 = vcombine.low %v1248, %v1264
        %v1273 = vcombine.high %v1248, %v1264
        %v1275 = vunpack.c.l.s4 1934713408
        %v1276 = vunpack.c.0.s8 %v1275
        %v1277 = vlaneseq
        %v1278 = vshrl.u32 %v1277, 7
        %v1279 = vsub.s32 %v1276, %v1278
        %v1280 = vrot.slane %v1272, %v1279
        %v1282 = vunpack.c.l.s4 1934713408
        %v1283 = vunpack.c.0.s8 %v1282
        %v1284 = vlaneseq
        %v1285 = vshrl.u32 %v1284, 7
        %v1286 = vsub.s32 %v1283, %v1285
        %v1287 = vrot.slane %v1273, %v1286
        %v1288 = vcombine.low %v1255, %v1271
        %v1289 = vcombine.high %v1255, %v1271
        %v1291 = vunpack.c.l.s4 1934713408
        %v1292 = vunpack.c.0.s8 %v1291
        %v1293 = vlaneseq
        %v1294 = vshrl.u32 %v1293, 7
        %v1295 = vsub.s32 %v1292, %v1294
        %v1296 = vrot.slane %v1288, %v1295
        %v1298 = vunpack.c.l.s4 1934713408
        %v1299 = vunpack.c.0.s8 %v1298
        %v1300 = vlaneseq
        %v1301 = vshrl.u32 %v1300, 7
        %v1302 = vsub.s32 %v1299, %v1301
        %v1303 = vrot.slane %v1289, %v1302
        %v1304 = vcombine.high %v1280, 0.0
        %v1305 = vcombine.high %v1287, 0.0
        %v1306 = vcombine.high %v1296, 0.0
        %v1307 = vcombine.high %v1303, 0.0
        %v1308 = vcombine.low %v1280, %v1287
        %v1310 = vunpack.c.l.s4 1983009808
        %v1311 = vunpack.c.0.s8 %v1310
        %v1312 = vlaneseq
        %v1313 = vshrl.u32 %v1312, 7
        %v1314 = vsub.s32 %v1311, %v1313
        %v1315 = vrot.slane %v1308, %v1314
        %v1316 = vcombine.low %v1304, %v1305
        %v1318 = vunpack.c.l.s4 1983009808
        %v1319 = vunpack.c.0.s8 %v1318
        %v1320 = vlaneseq
        %v1321 = vshrl.u32 %v1320, 7
        %v1322 = vsub.s32 %v1319, %v1321
        %v1323 = vrot.slane %v1316, %v1322
        %v1324 = vcombine.low %v1296, %v1303
        %v1326 = vunpack.c.l.s4 1983009808
        %v1327 = vunpack.c.0.s8 %v1326
        %v1328 = vlaneseq
        %v1329 = vshrl.u32 %v1328, 7
        %v1330 = vsub.s32 %v1327, %v1329
        %v1331 = vrot.slane %v1324, %v1330
        %v1332 = vcombine.low %v1306, %v1307
        %v1334 = vunpack.c.l.s4 1983009808
        %v1335 = vunpack.c.0.s8 %v1334
        %v1336 = vlaneseq
        %v1337 = vshrl.u32 %v1336, 7
        %v1338 = vsub.s32 %v1335, %v1337
        %v1339 = vrot.slane %v1332, %v1338
        %v1340 = vcombine.low %v1315, %v1323
        %v1341 = vcombine.high %v1315, %v1323
        %v1343 = vunpack.c.l.s4 1934713408
        %v1344 = vunpack.c.0.s8 %v1343
        %v1345 = vlaneseq
        %v1346 = vshrl.u32 %v1345, 7
        %v1347 = vsub.s32 %v1344, %v1346
        %v1348 = vrot.slane %v1340, %v1347
        %v1350 = vunpack.c.l.s4 1934713408
        %v1351 = vunpack.c.0.s8 %v1350
        %v1352 = vlaneseq
        %v1353 = vshrl.u32 %v1352, 7
        %v1354 = vsub.s32 %v1351, %v1353
        %v1355 = vrot.slane %v1341, %v1354
        %v1356 = vcombine.low %v1331, %v1339
        %v1357 = vcombine.high %v1331, %v1339
        %v1359 = vunpack.c.l.s4 1934713408
        %v1360 = vunpack.c.0.s8 %v1359
        %v1361 = vlaneseq
        %v1362 = vshrl.u32 %v1361, 7
        %v1363 = vsub.s32 %v1360, %v1362
        %v1364 = vrot.slane %v1356, %v1363
        %v1366 = vunpack.c.l.s4 1934713408
        %v1367 = vunpack.c.0.s8 %v1366
        %v1368 = vlaneseq
        %v1369 = vshrl.u32 %v1368, 7
        %v1370 = vsub.s32 %v1367, %v1369
        %v1371 = vrot.slane %v1357, %v1370
        %v1372 = vcombine.low %v1348, %v1364
        %v1373 = vcombine.high %v1348, %v1364
        %v1374 = vcombine.low %v1355, %v1371
        %v1375 = vcombine.high %v1355, %v1371
        %v1376 = vpack.c.bf16 %v1372, %v1372
        %v1377 = vpack.c.bf16 %v1373, %v1373
        %v1378 = vpack.c.bf16 %v1374, %v1374
        %v1379 = vpack.c.bf16 %v1375, %v1375
        %v1380 = vld [vmem:[%s614] sm:$0xff]
        %v1381 = vld [vmem:[%s614 + $0x8] sm:$0xff]
        %v1382 = vld [vmem:[%s614 + $0x10] sm:$0xff]
        %v1383 = vld [vmem:[%s614 + $0x18] sm:$0xff]
        %vm1384 = vcmask 64512
        %v1386 = vsel %vm1384, %v1076, 0
        %v1389 = vsel %vm1384, %v1226, 0
        %1391 = vmatprep.subr.bf16.mxu0 0
        %1392 = vmatpush1.bf16.xpose.msra.mxu0 0
        %1393 = vmatprep.subr.bf16.mxu0 0
        %1394 = vmatpush1.bf16.xpose.msra.mxu0 0
        %1395 = vmatprep.subr.bf16.mxu0 0
        %1396 = vmatpush1.bf16.xpose.msra.mxu0 0
        %1397 = vmatprep.subr.bf16.mxu0 0
        %1398 = vmatpush1.bf16.xpose.msra.mxu0 0
        %1399 = vmatprep.subr.bf16.mxu0 0
        %1400 = vmatpush1.bf16.xpose.msra.mxu0 0
        %1401 = vmatprep.subr.bf16.mxu0 0
        %1402 = vmatpush1.bf16.xpose.msra.mxu0 0
        %1403 = vmatprep.subr.bf16.mxu0 0
        %1404 = vmatpush1.bf16.xpose.msra.mxu0 0
        %1405 = vmatprep.subr.bf16.mxu0 0
        %1406 = vmatpush1.bf16.xpose.msra.mxu0 %v1389
        %1407 = vmatprep.subr.bf16.mxu0 0
        %1408 = vmatpush2.bf16.xpose.msra.mxu0 0
        %1409 = vmatprep.subr.bf16.mxu0 0
        %1410 = vmatpush2.bf16.xpose.msra.mxu0 0
        %1411 = vmatprep.subr.bf16.mxu0 0
        %1412 = vmatpush2.bf16.xpose.msra.mxu0 0
        %1413 = vmatprep.subr.bf16.mxu0 0
        %1414 = vmatpush2.bf16.xpose.msra.mxu0 0
        %1415 = vmatprep.subr.bf16.mxu0 0
        %1416 = vmatpush2.bf16.xpose.msra.mxu0 0
        %1417 = vmatprep.subr.bf16.mxu0 0
        %1418 = vmatpush2.bf16.xpose.msra.mxu0 0
        %1419 = vmatprep.subr.bf16.mxu0 0
        %1420 = vmatpush2.bf16.xpose.msra.mxu0 0
        %1421 = vmatprep.subr.bf16.mxu0 0
        %1422 = vmatpush2.bf16.xpose.msra.mxu0 0
        %1423 = vmatprep.mubr.bf16.mxu0 0
        %1424 = vmatmul.mubr.bf16.gmra.mxu0 %v1386
        %v1425 = vpop.f32.mrf.mxu0
        %v1426 = vadd.f32 %v1380, %v1425
        %v1427 = vpop.f32.mrf.mxu0
        %v1428 = vpop.f32.mrf.mxu0
        %v1429 = vpop.f32.mrf.mxu0
        %1430 = vdwg.mxu0
        %v1432 = vsel %vm1384, %v1077, 0
        %v1435 = vsel %vm1384, %v1227, 0
        %1437 = vmatprep.subr.bf16.mxu0 0
        %1438 = vmatpush1.bf16.xpose.msra.mxu0 0
        %1439 = vmatprep.subr.bf16.mxu0 0
        %1440 = vmatpush1.bf16.xpose.msra.mxu0 0
        %1441 = vmatprep.subr.bf16.mxu0 0
        %1442 = vmatpush1.bf16.xpose.msra.mxu0 0
        %1443 = vmatprep.subr.bf16.mxu0 0
        %1444 = vmatpush1.bf16.xpose.msra.mxu0 0
        %1445 = vmatprep.subr.bf16.mxu0 0
        %1446 = vmatpush1.bf16.xpose.msra.mxu0 0
        %1447 = vmatprep.subr.bf16.mxu0 0
        %1448 = vmatpush1.bf16.xpose.msra.mxu0 0
        %1449 = vmatprep.subr.bf16.mxu0 0
        %1450 = vmatpush1.bf16.xpose.msra.mxu0 0
        %1451 = vmatprep.subr.bf16.mxu0 0
        %1452 = vmatpush1.bf16.xpose.msra.mxu0 %v1435
        %1453 = vmatprep.subr.bf16.mxu0 0
        %1454 = vmatpush2.bf16.xpose.msra.mxu0 0
        %1455 = vmatprep.subr.bf16.mxu0 0
        %1456 = vmatpush2.bf16.xpose.msra.mxu0 0
        %1457 = vmatprep.subr.bf16.mxu0 0
        %1458 = vmatpush2.bf16.xpose.msra.mxu0 0
        %1459 = vmatprep.subr.bf16.mxu0 0
        %1460 = vmatpush2.bf16.xpose.msra.mxu0 0
        %1461 = vmatprep.subr.bf16.mxu0 0
        %1462 = vmatpush2.bf16.xpose.msra.mxu0 0
        %1463 = vmatprep.subr.bf16.mxu0 0
        %1464 = vmatpush2.bf16.xpose.msra.mxu0 0
        %1465 = vmatprep.subr.bf16.mxu0 0
        %1466 = vmatpush2.bf16.xpose.msra.mxu0 0
        %1467 = vmatprep.subr.bf16.mxu0 0
        %1468 = vmatpush2.bf16.xpose.msra.mxu0 0
        %1469 = vmatprep.mubr.bf16.mxu0 0
        %1470 = vmatmul.mubr.bf16.gmra.mxu0 %v1432
        %v1471 = vpop.f32.mrf.mxu0
        %v1472 = vadd.f32 %v1381, %v1471
        %v1473 = vpop.f32.mrf.mxu0
        %v1474 = vpop.f32.mrf.mxu0
        %v1475 = vpop.f32.mrf.mxu0
        %1476 = vdwg.mxu0
        %v1478 = vsel %vm1384, %v1078, 0
        %v1481 = vsel %vm1384, %v1228, 0
        %1483 = vmatprep.subr.bf16.mxu0 0
        %1484 = vmatpush1.bf16.xpose.msra.mxu0 0
        %1485 = vmatprep.subr.bf16.mxu0 0
        %1486 = vmatpush1.bf16.xpose.msra.mxu0 0
        %1487 = vmatprep.subr.bf16.mxu0 0
        %1488 = vmatpush1.bf16.xpose.msra.mxu0 0
        %1489 = vmatprep.subr.bf16.mxu0 0
        %1490 = vmatpush1.bf16.xpose.msra.mxu0 0
        %1491 = vmatprep.subr.bf16.mxu0 0
        %1492 = vmatpush1.bf16.xpose.msra.mxu0 0
        %1493 = vmatprep.subr.bf16.mxu0 0
        %1494 = vmatpush1.bf16.xpose.msra.mxu0 0
        %1495 = vmatprep.subr.bf16.mxu0 0
        %1496 = vmatpush1.bf16.xpose.msra.mxu0 0
        %1497 = vmatprep.subr.bf16.mxu0 0
        %1498 = vmatpush1.bf16.xpose.msra.mxu0 %v1481
        %1499 = vmatprep.subr.bf16.mxu0 0
        %1500 = vmatpush2.bf16.xpose.msra.mxu0 0
        %1501 = vmatprep.subr.bf16.mxu0 0
        %1502 = vmatpush2.bf16.xpose.msra.mxu0 0
        %1503 = vmatprep.subr.bf16.mxu0 0
        %1504 = vmatpush2.bf16.xpose.msra.mxu0 0
        %1505 = vmatprep.subr.bf16.mxu0 0
        %1506 = vmatpush2.bf16.xpose.msra.mxu0 0
        %1507 = vmatprep.subr.bf16.mxu0 0
        %1508 = vmatpush2.bf16.xpose.msra.mxu0 0
        %1509 = vmatprep.subr.bf16.mxu0 0
        %1510 = vmatpush2.bf16.xpose.msra.mxu0 0
        %1511 = vmatprep.subr.bf16.mxu0 0
        %1512 = vmatpush2.bf16.xpose.msra.mxu0 0
        %1513 = vmatprep.subr.bf16.mxu0 0
        %1514 = vmatpush2.bf16.xpose.msra.mxu0 0
        %1515 = vmatprep.mubr.bf16.mxu0 0
        %1516 = vmatmul.mubr.bf16.gmra.mxu0 %v1478
        %v1517 = vpop.f32.mrf.mxu0
        %v1518 = vadd.f32 %v1382, %v1517
        %v1519 = vpop.f32.mrf.mxu0
        %v1520 = vpop.f32.mrf.mxu0
        %v1521 = vpop.f32.mrf.mxu0
        %1522 = vdwg.mxu0
        %v1524 = vsel %vm1384, %v1079, 0
        %v1527 = vsel %vm1384, %v1229, 0
        %1529 = vmatprep.subr.bf16.mxu0 0
        %1530 = vmatpush1.bf16.xpose.msra.mxu0 0
        %1531 = vmatprep.subr.bf16.mxu0 0
        %1532 = vmatpush1.bf16.xpose.msra.mxu0 0
        %1533 = vmatprep.subr.bf16.mxu0 0
        %1534 = vmatpush1.bf16.xpose.msra.mxu0 0
        %1535 = vmatprep.subr.bf16.mxu0 0
        %1536 = vmatpush1.bf16.xpose.msra.mxu0 0
        %1537 = vmatprep.subr.bf16.mxu0 0
        %1538 = vmatpush1.bf16.xpose.msra.mxu0 0
        %1539 = vmatprep.subr.bf16.mxu0 0
        %1540 = vmatpush1.bf16.xpose.msra.mxu0 0
        %1541 = vmatprep.subr.bf16.mxu0 0
        %1542 = vmatpush1.bf16.xpose.msra.mxu0 0
        %1543 = vmatprep.subr.bf16.mxu0 0
        %1544 = vmatpush1.bf16.xpose.msra.mxu0 %v1527
        %1545 = vmatprep.subr.bf16.mxu0 0
        %1546 = vmatpush2.bf16.xpose.msra.mxu0 0
        %1547 = vmatprep.subr.bf16.mxu0 0
        %1548 = vmatpush2.bf16.xpose.msra.mxu0 0
        %1549 = vmatprep.subr.bf16.mxu0 0
        %1550 = vmatpush2.bf16.xpose.msra.mxu0 0
        %1551 = vmatprep.subr.bf16.mxu0 0
        %1552 = vmatpush2.bf16.xpose.msra.mxu0 0
        %1553 = vmatprep.subr.bf16.mxu0 0
        %1554 = vmatpush2.bf16.xpose.msra.mxu0 0
        %1555 = vmatprep.subr.bf16.mxu0 0
        %1556 = vmatpush2.bf16.xpose.msra.mxu0 0
        %1557 = vmatprep.subr.bf16.mxu0 0
        %1558 = vmatpush2.bf16.xpose.msra.mxu0 0
        %1559 = vmatprep.subr.bf16.mxu0 0
        %1560 = vmatpush2.bf16.xpose.msra.mxu0 0
        %1561 = vmatprep.mubr.bf16.mxu0 0
        %1562 = vmatmul.mubr.bf16.gmra.mxu0 %v1524
        %v1563 = vpop.f32.mrf.mxu0
        %v1564 = vadd.f32 %v1383, %v1563
        %v1565 = vpop.f32.mrf.mxu0
        %v1566 = vpop.f32.mrf.mxu0
        %v1567 = vpop.f32.mrf.mxu0
        %1568 = vdwg.mxu0
        %v1569 = vsel %vm1384, %v1426, -inf
        %1570 = vmax.xlane.f32.xlu0 %v1569
        %v1571 = vpop.xlane.xlu0 %1570
        %v1572 = vsel %vm1384, %v1472, -inf
        %1573 = vmax.xlane.f32.xlu0 %v1572
        %v1574 = vpop.xlane.xlu0 %1573
        %v1575 = vsel %vm1384, %v1518, -inf
        %1576 = vmax.xlane.f32.xlu0 %v1575
        %v1577 = vpop.xlane.xlu0 %1576
        %v1578 = vsel %vm1384, %v1564, -inf
        %1579 = vmax.xlane.f32.xlu0 %v1578
        %v1580 = vpop.xlane.xlu0 %1579
        %v1581 = vsub.f32 %v1426, %v1571
        %v1582 = vsub.f32 %v1472, %v1574
        %v1583 = vsub.f32 %v1518, %v1577
        %v1584 = vsub.f32 %v1564, %v1580
        %v1585 = vmul.f32 %v1581, 1.442695
        %v1586 = vpow.pop %v1585
        %v1587 = vmul.f32 %v1582, 1.442695
        %v1588 = vpow.pop %v1587
        %v1589 = vmul.f32 %v1583, 1.442695
        %v1590 = vpow.pop %v1589
        %v1591 = vmul.f32 %v1584, 1.442695
        %v1592 = vpow.pop %v1591
        %v1593 = vsel %vm1384, %v1586, 0.0
        %1594 = vadd.xlane.f32.xlu0 %v1593
        %v1595 = vpop.xlane.xlu0 %1594
        %v1596 = vsel %vm1384, %v1588, 0.0
        %1597 = vadd.xlane.f32.xlu0 %v1596
        %v1598 = vpop.xlane.xlu0 %1597
        %v1599 = vsel %vm1384, %v1590, 0.0
        %1600 = vadd.xlane.f32.xlu0 %v1599
        %v1601 = vpop.xlane.xlu0 %1600
        %v1602 = vsel %vm1384, %v1592, 0.0
        %1603 = vadd.xlane.f32.xlu0 %v1602
        %v1604 = vpop.xlane.xlu0 %1603
        %v1605 = vrcp.pop %v1595
        %v1606 = vrcp.pop %v1598
        %v1607 = vrcp.pop %v1601
        %v1608 = vrcp.pop %v1604
        %v1609 = vmul.f32 %v1586, %v1605
        %v1610 = vmul.f32 %v1588, %v1606
        %v1611 = vmul.f32 %v1590, %v1607
        %v1612 = vmul.f32 %v1592, %v1608
        %v1613 = vpack.c.bf16 %v1609, %v1609
        %v1614 = vpack.c.bf16 %v1610, %v1610
        %v1615 = vpack.c.bf16 %v1611, %v1611
        %v1616 = vpack.c.bf16 %v1612, %v1612
        %v1618 = vsel %vm1384, %v1613, 0
        %vm1620 = vcmask 1043456
        %v1622 = vsel %vm1620, %v1376, 0
        %1624 = vmatprep.subr.bf16.mxu0 0
        %1625 = vmatpush1.bf16.msra.mxu0 0
        %1626 = vmatprep.subr.bf16.mxu0 0
        %1627 = vmatpush1.bf16.msra.mxu0 0
        %1628 = vmatprep.subr.bf16.mxu0 0
        %1629 = vmatpush1.bf16.msra.mxu0 0
        %1630 = vmatprep.subr.bf16.mxu0 0
        %1631 = vmatpush1.bf16.msra.mxu0 0
        %1632 = vmatprep.subr.bf16.mxu0 0
        %1633 = vmatpush1.bf16.msra.mxu0 0
        %1634 = vmatprep.subr.bf16.mxu0 0
        %1635 = vmatpush1.bf16.msra.mxu0 0
        %1636 = vmatprep.subr.bf16.mxu0 0
        %1637 = vmatpush1.bf16.msra.mxu0 0
        %1638 = vmatprep.subr.bf16.mxu0 0
        %1639 = vmatpush1.bf16.msra.mxu0 %v1622
        %1640 = vmatprep.subr.bf16.mxu0 0
        %1641 = vmatpush2.bf16.msra.mxu0 0
        %1642 = vmatprep.subr.bf16.mxu0 0
        %1643 = vmatpush2.bf16.msra.mxu0 0
        %1644 = vmatprep.subr.bf16.mxu0 0
        %1645 = vmatpush2.bf16.msra.mxu0 0
        %1646 = vmatprep.subr.bf16.mxu0 0
        %1647 = vmatpush2.bf16.msra.mxu0 0
        %1648 = vmatprep.subr.bf16.mxu0 0
        %1649 = vmatpush2.bf16.msra.mxu0 0
        %1650 = vmatprep.subr.bf16.mxu0 0
        %1651 = vmatpush2.bf16.msra.mxu0 0
        %1652 = vmatprep.subr.bf16.mxu0 0
        %1653 = vmatpush2.bf16.msra.mxu0 0
        %1654 = vmatprep.subr.bf16.mxu0 0
        %1655 = vmatpush2.bf16.msra.mxu0 0
        %1656 = vmatprep.mubr.bf16.mxu0 0
        %1657 = vmatmul.mubr.bf16.gmra.mxu0 %v1618
        %v1658 = vpop.f32.mrf.mxu0
        %v1659 = vadd.f32 0.0, %v1658
        %v1660 = vpop.f32.mrf.mxu0
        %v1661 = vpop.f32.mrf.mxu0
        %v1662 = vpop.f32.mrf.mxu0
        %1663 = vdwg.mxu0
        %v1665 = vsel %vm1384, %v1614, 0
        %v1668 = vsel %vm1620, %v1377, 0
        %1670 = vmatprep.subr.bf16.mxu0 0
        %1671 = vmatpush1.bf16.msra.mxu0 0
        %1672 = vmatprep.subr.bf16.mxu0 0
        %1673 = vmatpush1.bf16.msra.mxu0 0
        %1674 = vmatprep.subr.bf16.mxu0 0
        %1675 = vmatpush1.bf16.msra.mxu0 0
        %1676 = vmatprep.subr.bf16.mxu0 0
        %1677 = vmatpush1.bf16.msra.mxu0 0
        %1678 = vmatprep.subr.bf16.mxu0 0
        %1679 = vmatpush1.bf16.msra.mxu0 0
        %1680 = vmatprep.subr.bf16.mxu0 0
        %1681 = vmatpush1.bf16.msra.mxu0 0
        %1682 = vmatprep.subr.bf16.mxu0 0
        %1683 = vmatpush1.bf16.msra.mxu0 0
        %1684 = vmatprep.subr.bf16.mxu0 0
        %1685 = vmatpush1.bf16.msra.mxu0 %v1668
        %1686 = vmatprep.subr.bf16.mxu0 0
        %1687 = vmatpush2.bf16.msra.mxu0 0
        %1688 = vmatprep.subr.bf16.mxu0 0
        %1689 = vmatpush2.bf16.msra.mxu0 0
        %1690 = vmatprep.subr.bf16.mxu0 0
        %1691 = vmatpush2.bf16.msra.mxu0 0
        %1692 = vmatprep.subr.bf16.mxu0 0
        %1693 = vmatpush2.bf16.msra.mxu0 0
        %1694 = vmatprep.subr.bf16.mxu0 0
        %1695 = vmatpush2.bf16.msra.mxu0 0
        %1696 = vmatprep.subr.bf16.mxu0 0
        %1697 = vmatpush2.bf16.msra.mxu0 0
        %1698 = vmatprep.subr.bf16.mxu0 0
        %1699 = vmatpush2.bf16.msra.mxu0 0
        %1700 = vmatprep.subr.bf16.mxu0 0
        %1701 = vmatpush2.bf16.msra.mxu0 0
        %1702 = vmatprep.mubr.bf16.mxu0 0
        %1703 = vmatmul.mubr.bf16.gmra.mxu0 %v1665
        %v1704 = vpop.f32.mrf.mxu0
        %v1705 = vadd.f32 0.0, %v1704
        %v1706 = vpop.f32.mrf.mxu0
        %v1707 = vpop.f32.mrf.mxu0
        %v1708 = vpop.f32.mrf.mxu0
        %1709 = vdwg.mxu0
        %v1711 = vsel %vm1384, %v1615, 0
        %v1714 = vsel %vm1620, %v1378, 0
        %1716 = vmatprep.subr.bf16.mxu0 0
        %1717 = vmatpush1.bf16.msra.mxu0 0
        %1718 = vmatprep.subr.bf16.mxu0 0
        %1719 = vmatpush1.bf16.msra.mxu0 0
        %1720 = vmatprep.subr.bf16.mxu0 0
        %1721 = vmatpush1.bf16.msra.mxu0 0
        %1722 = vmatprep.subr.bf16.mxu0 0
        %1723 = vmatpush1.bf16.msra.mxu0 0
        %1724 = vmatprep.subr.bf16.mxu0 0
        %1725 = vmatpush1.bf16.msra.mxu0 0
        %1726 = vmatprep.subr.bf16.mxu0 0
        %1727 = vmatpush1.bf16.msra.mxu0 0
        %1728 = vmatprep.subr.bf16.mxu0 0
        %1729 = vmatpush1.bf16.msra.mxu0 0
        %1730 = vmatprep.subr.bf16.mxu0 0
        %1731 = vmatpush1.bf16.msra.mxu0 %v1714
        %1732 = vmatprep.subr.bf16.mxu0 0
        %1733 = vmatpush2.bf16.msra.mxu0 0
        %1734 = vmatprep.subr.bf16.mxu0 0
        %1735 = vmatpush2.bf16.msra.mxu0 0
        %1736 = vmatprep.subr.bf16.mxu0 0
        %1737 = vmatpush2.bf16.msra.mxu0 0
        %1738 = vmatprep.subr.bf16.mxu0 0
        %1739 = vmatpush2.bf16.msra.mxu0 0
        %1740 = vmatprep.subr.bf16.mxu0 0
        %1741 = vmatpush2.bf16.msra.mxu0 0
        %1742 = vmatprep.subr.bf16.mxu0 0
        %1743 = vmatpush2.bf16.msra.mxu0 0
        %1744 = vmatprep.subr.bf16.mxu0 0
        %1745 = vmatpush2.bf16.msra.mxu0 0
        %1746 = vmatprep.subr.bf16.mxu0 0
        %1747 = vmatpush2.bf16.msra.mxu0 0
        %1748 = vmatprep.mubr.bf16.mxu0 0
        %1749 = vmatmul.mubr.bf16.gmra.mxu0 %v1711
        %v1750 = vpop.f32.mrf.mxu0
        %v1751 = vadd.f32 0.0, %v1750
        %v1752 = vpop.f32.mrf.mxu0
        %v1753 = vpop.f32.mrf.mxu0
        %v1754 = vpop.f32.mrf.mxu0
        %1755 = vdwg.mxu0
        %v1757 = vsel %vm1384, %v1616, 0
        %v1760 = vsel %vm1620, %v1379, 0
        %1762 = vmatprep.subr.bf16.mxu0 0
        %1763 = vmatpush1.bf16.msra.mxu0 0
        %1764 = vmatprep.subr.bf16.mxu0 0
        %1765 = vmatpush1.bf16.msra.mxu0 0
        %1766 = vmatprep.subr.bf16.mxu0 0
        %1767 = vmatpush1.bf16.msra.mxu0 0
        %1768 = vmatprep.subr.bf16.mxu0 0
        %1769 = vmatpush1.bf16.msra.mxu0 0
        %1770 = vmatprep.subr.bf16.mxu0 0
        %1771 = vmatpush1.bf16.msra.mxu0 0
        %1772 = vmatprep.subr.bf16.mxu0 0
        %1773 = vmatpush1.bf16.msra.mxu0 0
        %1774 = vmatprep.subr.bf16.mxu0 0
        %1775 = vmatpush1.bf16.msra.mxu0 0
        %1776 = vmatprep.subr.bf16.mxu0 0
        %1777 = vmatpush1.bf16.msra.mxu0 %v1760
        %1778 = vmatprep.subr.bf16.mxu0 0
        %1779 = vmatpush2.bf16.msra.mxu0 0
        %1780 = vmatprep.subr.bf16.mxu0 0
        %1781 = vmatpush2.bf16.msra.mxu0 0
        %1782 = vmatprep.subr.bf16.mxu0 0
        %1783 = vmatpush2.bf16.msra.mxu0 0
        %1784 = vmatprep.subr.bf16.mxu0 0
        %1785 = vmatpush2.bf16.msra.mxu0 0
        %1786 = vmatprep.subr.bf16.mxu0 0
        %1787 = vmatpush2.bf16.msra.mxu0 0
        %1788 = vmatprep.subr.bf16.mxu0 0
        %1789 = vmatpush2.bf16.msra.mxu0 0
        %1790 = vmatprep.subr.bf16.mxu0 0
        %1791 = vmatpush2.bf16.msra.mxu0 0
        %1792 = vmatprep.subr.bf16.mxu0 0
        %1793 = vmatpush2.bf16.msra.mxu0 0
        %1794 = vmatprep.mubr.bf16.mxu0 0
        %1795 = vmatmul.mubr.bf16.gmra.mxu0 %v1757
        %v1796 = vpop.f32.mrf.mxu0
        %v1797 = vadd.f32 0.0, %v1796
        %v1798 = vpop.f32.mrf.mxu0
        %v1799 = vpop.f32.mrf.mxu0
        %v1800 = vpop.f32.mrf.mxu0
        %1801 = vdwg.mxu0
        %v1802 = vcombine.low %v1659, %v1751
        %v1803 = vcombine.high %v1659, %v1751
        %v1805 = vunpack.c.l.s4 1983009808
        %v1806 = vunpack.c.0.s8 %v1805
        %v1807 = vlaneseq
        %v1808 = vshrl.u32 %v1807, 7
        %v1809 = vsub.s32 %v1806, %v1808
        %v1810 = vrot.slane %v1802, %v1809
        %v1812 = vunpack.c.l.s4 1983009808
        %v1813 = vunpack.c.0.s8 %v1812
        %v1814 = vlaneseq
        %v1815 = vshrl.u32 %v1814, 7
        %v1816 = vsub.s32 %v1813, %v1815
        %v1817 = vrot.slane %v1803, %v1816
        %v1818 = vcombine.low %v1705, %v1797
        %v1819 = vcombine.high %v1705, %v1797
        %v1821 = vunpack.c.l.s4 1983009808
        %v1822 = vunpack.c.0.s8 %v1821
        %v1823 = vlaneseq
        %v1824 = vshrl.u32 %v1823, 7
        %v1825 = vsub.s32 %v1822, %v1824
        %v1826 = vrot.slane %v1818, %v1825
        %v1828 = vunpack.c.l.s4 1983009808
        %v1829 = vunpack.c.0.s8 %v1828
        %v1830 = vlaneseq
        %v1831 = vshrl.u32 %v1830, 7
        %v1832 = vsub.s32 %v1829, %v1831
        %v1833 = vrot.slane %v1819, %v1832
        %v1834 = vcombine.low %v1810, %v1826
        %v1835 = vcombine.high %v1810, %v1826
        %v1837 = vunpack.c.l.s4 1934713408
        %v1838 = vunpack.c.0.s8 %v1837
        %v1839 = vlaneseq
        %v1840 = vshrl.u32 %v1839, 7
        %v1841 = vsub.s32 %v1838, %v1840
        %v1842 = vrot.slane %v1834, %v1841
        %v1844 = vunpack.c.l.s4 1934713408
        %v1845 = vunpack.c.0.s8 %v1844
        %v1846 = vlaneseq
        %v1847 = vshrl.u32 %v1846, 7
        %v1848 = vsub.s32 %v1845, %v1847
        %v1849 = vrot.slane %v1835, %v1848
        %v1850 = vcombine.low %v1817, %v1833
        %v1851 = vcombine.high %v1817, %v1833
        %v1853 = vunpack.c.l.s4 1934713408
        %v1854 = vunpack.c.0.s8 %v1853
        %v1855 = vlaneseq
        %v1856 = vshrl.u32 %v1855, 7
        %v1857 = vsub.s32 %v1854, %v1856
        %v1858 = vrot.slane %v1850, %v1857
        %v1860 = vunpack.c.l.s4 1934713408
        %v1861 = vunpack.c.0.s8 %v1860
        %v1862 = vlaneseq
        %v1863 = vshrl.u32 %v1862, 7
        %v1864 = vsub.s32 %v1861, %v1863
        %v1865 = vrot.slane %v1851, %v1864
        %v1866 = vcombine.high %v1842, 0.0
        %v1867 = vcombine.high %v1849, 0.0
        %v1868 = vcombine.high %v1858, 0.0
        %v1869 = vcombine.high %v1865, 0.0
        %v1870 = vcombine.low %v1842, %v1849
        %v1872 = vunpack.c.l.s4 1983009808
        %v1873 = vunpack.c.0.s8 %v1872
        %v1874 = vlaneseq
        %v1875 = vshrl.u32 %v1874, 7
        %v1876 = vsub.s32 %v1873, %v1875
        %v1877 = vrot.slane %v1870, %v1876
        %v1878 = vcombine.low %v1866, %v1867
        %v1880 = vunpack.c.l.s4 1983009808
        %v1881 = vunpack.c.0.s8 %v1880
        %v1882 = vlaneseq
        %v1883 = vshrl.u32 %v1882, 7
        %v1884 = vsub.s32 %v1881, %v1883
        %v1885 = vrot.slane %v1878, %v1884
        %v1886 = vcombine.low %v1858, %v1865
        %v1888 = vunpack.c.l.s4 1983009808
        %v1889 = vunpack.c.0.s8 %v1888
        %v1890 = vlaneseq
        %v1891 = vshrl.u32 %v1890, 7
        %v1892 = vsub.s32 %v1889, %v1891
        %v1893 = vrot.slane %v1886, %v1892
        %v1894 = vcombine.low %v1868, %v1869
        %v1896 = vunpack.c.l.s4 1983009808
        %v1897 = vunpack.c.0.s8 %v1896
        %v1898 = vlaneseq
        %v1899 = vshrl.u32 %v1898, 7
        %v1900 = vsub.s32 %v1897, %v1899
        %v1901 = vrot.slane %v1894, %v1900
        %v1902 = vcombine.low %v1877, %v1885
        %v1903 = vcombine.high %v1877, %v1885
        %v1905 = vunpack.c.l.s4 1934713408
        %v1906 = vunpack.c.0.s8 %v1905
        %v1907 = vlaneseq
        %v1908 = vshrl.u32 %v1907, 7
        %v1909 = vsub.s32 %v1906, %v1908
        %v1910 = vrot.slane %v1902, %v1909
        %v1912 = vunpack.c.l.s4 1934713408
        %v1913 = vunpack.c.0.s8 %v1912
        %v1914 = vlaneseq
        %v1915 = vshrl.u32 %v1914, 7
        %v1916 = vsub.s32 %v1913, %v1915
        %v1917 = vrot.slane %v1903, %v1916
        %v1918 = vcombine.low %v1893, %v1901
        %v1919 = vcombine.high %v1893, %v1901
        %v1921 = vunpack.c.l.s4 1934713408
        %v1922 = vunpack.c.0.s8 %v1921
        %v1923 = vlaneseq
        %v1924 = vshrl.u32 %v1923, 7
        %v1925 = vsub.s32 %v1922, %v1924
        %v1926 = vrot.slane %v1918, %v1925
        %v1928 = vunpack.c.l.s4 1934713408
        %v1929 = vunpack.c.0.s8 %v1928
        %v1930 = vlaneseq
        %v1931 = vshrl.u32 %v1930, 7
        %v1932 = vsub.s32 %v1929, %v1931
        %v1933 = vrot.slane %v1919, %v1932
        %v1934 = vcombine.low %v1910, %v1926
        %v1935 = vcombine.high %v1910, %v1926
        %v1936 = vcombine.low %v1917, %v1933
        %v1937 = vcombine.high %v1917, %v1933
        %1939 = vrot.lane.b32.xlu0 %v1935, 8
        %v1940 = vpop.permute.xlu0 %1939
        %1943 = vrot.lane.b32.xlu0 %v1936, 16
        %v1944 = vpop.permute.xlu0 %1943
        %1947 = vrot.lane.b32.xlu0 %v1937, 24
        %v1948 = vpop.permute.xlu0 %1947
        %v1950 = vsel %vm1384, %v1934, %v1940
        %vm1951 = vcmask 130048
        %v1952 = vsel %vm1951, %v1950, %v1944
        %vm1953 = vcmask 195584
        %v1954 = vsel %vm1953, %v1952, %v1948
        %v1955 = vpack.c.bf16 %v1954, %v1954
        %v1956 = vld [vmem:[%s10] sm:$0xf]
        %v1957 = vld [vmem:[%s10 + $0x4] sm:$0xf]
        %v1958 = vld [vmem:[%s10 + $0x8] sm:$0xf]
        %v1959 = vld [vmem:[%s10 + $0xc] sm:$0xf]
        %v1960 = vld [vmem:[%s11] sm:$0x1]
        %v1962 = vlaneseq
        %v1963 = vshrl.u32 %v1962, 7
        %v1964 = vsub.s32 0, %v1963
        %v1965 = vrot.slane %v1960, %v1964
        %v1971 = vunpack.c.l.b16 %v1956
        %v1972 = vunpack.c.l.b16 %v1957
        %v1973 = vunpack.c.l.b16 %v1958
        %v1974 = vunpack.c.l.b16 %v1959
        %v1975 = vpack.c.b16 %v1972, %v1971
        %v1976 = vpack.c.b16 %v1974, %v1973
        %v1980 = vsel %vm707, %v1955, 0
        %1982 = vmatprep.subr.bf16.mxu0 0
        %1983 = vmatpush1.bf16.msra.mxu0 0
        %1984 = vmatprep.subr.bf16.mxu0 0
        %1985 = vmatpush1.bf16.msra.mxu0 0
        %1986 = vmatprep.subr.bf16.mxu0 0
        %1987 = vmatpush1.bf16.msra.mxu0 0
        %1988 = vmatprep.subr.bf16.mxu0 0
        %1989 = vmatpush1.bf16.msra.mxu0 0
        %1990 = vmatprep.subr.bf16.mxu0 0
        %1991 = vmatpush1.bf16.msra.mxu0 0
        %1992 = vmatprep.subr.bf16.mxu0 0
        %1993 = vmatpush1.bf16.msra.mxu0 0
        %1994 = vmatprep.subr.bf16.mxu0 0
        %1995 = vmatpush1.bf16.msra.mxu0 %v1976
        %1996 = vmatprep.subr.bf16.mxu0 0
        %1997 = vmatpush1.bf16.msra.mxu0 %v1975
        %1998 = vmatprep.subr.bf16.mxu0 0
        %1999 = vmatpush2.bf16.msra.mxu0 0
        %2000 = vmatprep.subr.bf16.mxu0 0
        %2001 = vmatpush2.bf16.msra.mxu0 0
        %2002 = vmatprep.subr.bf16.mxu0 0
        %2003 = vmatpush2.bf16.msra.mxu0 0
        %2004 = vmatprep.subr.bf16.mxu0 0
        %2005 = vmatpush2.bf16.msra.mxu0 0
        %2006 = vmatprep.subr.bf16.mxu0 0
        %2007 = vmatpush2.bf16.msra.mxu0 0
        %2008 = vmatprep.subr.bf16.mxu0 0
        %2009 = vmatpush2.bf16.msra.mxu0 0
        %2010 = vmatprep.subr.bf16.mxu0 0
        %2011 = vmatpush2.bf16.msra.mxu0 0
        %2012 = vmatprep.subr.bf16.mxu0 0
        %2013 = vmatpush2.bf16.msra.mxu0 0
        %2014 = vmatprep.mubr.bf16.mxu0 0
        %2015 = vmatmul.mubr.bf16.gmra.mxu0 %v1980
        %v2016 = vpop.f32.mrf.mxu0
        %v2017 = vadd.f32 %v1965, %v2016
        %v2018 = vpop.f32.mrf.mxu0
        %v2019 = vpop.f32.mrf.mxu0
        %v2020 = vpop.f32.mrf.mxu0
        %2021 = vdwg.mxu0
        %v2022 = vadd.f32 %v704, %v2017
        %v2023 = vld [vmem:[%s12] sm:$0x1]
        %v2024 = vld [vmem:[%s13] sm:$0x1]
        %v2025 = vsel %vm707, %v2022, 0.0
        %2026 = vadd.xlane.f32.xlu0 %v2025
        %v2027 = vpop.xlane.xlu0 %2026
        %v2028 = vmul.f32 %v2027, %v711
        %v2029 = vsub.f32 %v2022, %v2028
        %v2030 = vmul.f32 %v2029, %v2029
        %v2031 = vsel %vm707, %v2030, 0.0
        %2032 = vadd.xlane.f32.xlu0 %v2031
        %v2033 = vpop.xlane.xlu0 %2032
        %v2034 = vmul.f32 %v2033, %v711
        %v2035 = vadd.f32 %v2034, 1e-05
        %v2036 = vrsqrt.pop %v2035
        %v2037 = vmul.f32 %v2029, %v2036
        %v2039 = vlaneseq
        %v2040 = vshrl.u32 %v2039, 7
        %v2041 = vsub.s32 0, %v2040
        %v2042 = vrot.slane %v2023, %v2041
        %v2044 = vmul.f32 %v2037, %v2042
        %v2046 = vlaneseq
        %v2047 = vshrl.u32 %v2046, 7
        %v2048 = vsub.s32 0, %v2047
        %v2049 = vrot.slane %v2024, %v2048
        %v2051 = vadd.f32 %v2044, %v2049
        %v2052 = vpack.c.bf16 %v2051, %v2051
        %v2053 = vld [vmem:[#allocation14] sm:$0xf]
        %v2054 = vld [vmem:[#allocation14 + $0x4] sm:$0xf]
        %v2055 = vld [vmem:[#allocation14 + $0x8] sm:$0xf]
        %v2056 = vld [vmem:[#allocation14 + $0xc] sm:$0xf]
        %v2057 = vld [vmem:[%s15] sm:$0x1]
        %v2059 = vlaneseq
        %v2060 = vshrl.u32 %v2059, 7
        %v2061 = vsub.s32 0, %v2060
        %v2062 = vrot.slane %v2057, %v2061
        %v2068 = vunpack.c.l.b16 %v2053
        %v2069 = vunpack.c.l.b16 %v2054
        %v2070 = vunpack.c.l.b16 %v2055
        %v2071 = vunpack.c.l.b16 %v2056
        %v2072 = vpack.c.b16 %v2069, %v2068
        %v2073 = vpack.c.b16 %v2071, %v2070
        %v2077 = vsel %vm707, %v2052, 0
        %2079 = vmatprep.subr.bf16.mxu0 0
        %2080 = vmatpush1.bf16.msra.mxu0 0
        %2081 = vmatprep.subr.bf16.mxu0 0
        %2082 = vmatpush1.bf16.msra.mxu0 0
        %2083 = vmatprep.subr.bf16.mxu0 0
        %2084 = vmatpush1.bf16.msra.mxu0 0
        %2085 = vmatprep.subr.bf16.mxu0 0
        %2086 = vmatpush1.bf16.msra.mxu0 0
        %2087 = vmatprep.subr.bf16.mxu0 0
        %2088 = vmatpush1.bf16.msra.mxu0 0
        %2089 = vmatprep.subr.bf16.mxu0 0
        %2090 = vmatpush1.bf16.msra.mxu0 0
        %2091 = vmatprep.subr.bf16.mxu0 0
        %2092 = vmatpush1.bf16.msra.mxu0 %v2073
        %2093 = vmatprep.subr.bf16.mxu0 0
        %2094 = vmatpush1.bf16.msra.mxu0 %v2072
        %2095 = vmatprep.subr.bf16.mxu0 0
        %2096 = vmatpush2.bf16.msra.mxu0 0
        %2097 = vmatprep.subr.bf16.mxu0 0
        %2098 = vmatpush2.bf16.msra.mxu0 0
        %2099 = vmatprep.subr.bf16.mxu0 0
        %2100 = vmatpush2.bf16.msra.mxu0 0
        %2101 = vmatprep.subr.bf16.mxu0 0
        %2102 = vmatpush2.bf16.msra.mxu0 0
        %2103 = vmatprep.subr.bf16.mxu0 0
        %2104 = vmatpush2.bf16.msra.mxu0 0
        %2105 = vmatprep.subr.bf16.mxu0 0
        %2106 = vmatpush2.bf16.msra.mxu0 0
        %2107 = vmatprep.subr.bf16.mxu0 0
        %2108 = vmatpush2.bf16.msra.mxu0 0
        %2109 = vmatprep.subr.bf16.mxu0 0
        %2110 = vmatpush2.bf16.msra.mxu0 0
        %2111 = vmatprep.mubr.bf16.mxu0 0
        %2112 = vmatmul.mubr.bf16.gmra.mxu0 %v2077
        %v2113 = vpop.f32.mrf.mxu0
        %v2114 = vadd.f32 %v2062, %v2113
        %v2115 = vpop.f32.mrf.mxu0
        %v2116 = vpop.f32.mrf.mxu0
        %v2117 = vpop.f32.mrf.mxu0
        %2118 = vdwg.mxu0
        %v2119 = vmul.f32 %v2114, 0.5
        %v2120 = vmul.f32 %v2114, 0.70710677
        %v2121 = verf.f32.pop %v2120
        %v2122 = vadd.f32 %v2121, 1.0
        %v2123 = vmul.f32 %v2119, %v2122
        %v2124 = vpack.c.bf16 %v2123, %v2123
        %v2125 = vld [vmem:[%s16] sm:$0xf]
        %v2126 = vld [vmem:[%s16 + $0x4] sm:$0xf]
        %v2127 = vld [vmem:[%s16 + $0x8] sm:$0xf]
        %v2128 = vld [vmem:[%s16 + $0xc] sm:$0xf]
        %v2129 = vld [vmem:[%s16 + $0x10] sm:$0xf]
        %v2130 = vld [vmem:[%s16 + $0x14] sm:$0xf]
        %v2131 = vld [vmem:[%s16 + $0x18] sm:$0xf]
        %v2132 = vld [vmem:[%s16 + $0x1c] sm:$0xf]
        %v2133 = vld [vmem:[%s17] sm:$0x1]
        %v2135 = vlaneseq
        %v2136 = vshrl.u32 %v2135, 7
        %v2137 = vsub.s32 0, %v2136
        %v2138 = vrot.slane %v2133, %v2137
        %v2148 = vunpack.c.l.b16 %v2125
        %v2149 = vunpack.c.l.b16 %v2126
        %v2150 = vunpack.c.l.b16 %v2127
        %v2151 = vunpack.c.l.b16 %v2128
        %v2152 = vunpack.c.l.b16 %v2129
        %v2153 = vunpack.c.l.b16 %v2130
        %v2154 = vunpack.c.l.b16 %v2131
        %v2155 = vunpack.c.l.b16 %v2132
        %v2156 = vpack.c.b16 %v2149, %v2148
        %v2157 = vpack.c.b16 %v2151, %v2150
        %v2158 = vpack.c.b16 %v2153, %v2152
        %v2159 = vpack.c.b16 %v2155, %v2154
        %vm2164 = vcmask 523264
        %v2166 = vsel %vm2164, %v2124, 0
        %2168 = vmatprep.subr.bf16.mxu0 0
        %2169 = vmatpush1.bf16.msra.mxu0 0
        %2170 = vmatprep.subr.bf16.mxu0 0
        %2171 = vmatpush1.bf16.msra.mxu0 0
        %2172 = vmatprep.subr.bf16.mxu0 0
        %2173 = vmatpush1.bf16.msra.mxu0 0
        %2174 = vmatprep.subr.bf16.mxu0 0
        %2175 = vmatpush1.bf16.msra.mxu0 0
        %2176 = vmatprep.subr.bf16.mxu0 0
        %2177 = vmatpush1.bf16.msra.mxu0 %v2159
        %2178 = vmatprep.subr.bf16.mxu0 0
        %2179 = vmatpush1.bf16.msra.mxu0 %v2158
        %2180 = vmatprep.subr.bf16.mxu0 0
        %2181 = vmatpush1.bf16.msra.mxu0 %v2157
        %2182 = vmatprep.subr.bf16.mxu0 0
        %2183 = vmatpush1.bf16.msra.mxu0 %v2156
        %2184 = vmatprep.subr.bf16.mxu0 0
        %2185 = vmatpush2.bf16.msra.mxu0 0
        %2186 = vmatprep.subr.bf16.mxu0 0
        %2187 = vmatpush2.bf16.msra.mxu0 0
        %2188 = vmatprep.subr.bf16.mxu0 0
        %2189 = vmatpush2.bf16.msra.mxu0 0
        %2190 = vmatprep.subr.bf16.mxu0 0
        %2191 = vmatpush2.bf16.msra.mxu0 0
        %2192 = vmatprep.subr.bf16.mxu0 0
        %2193 = vmatpush2.bf16.msra.mxu0 0
        %2194 = vmatprep.subr.bf16.mxu0 0
        %2195 = vmatpush2.bf16.msra.mxu0 0
        %2196 = vmatprep.subr.bf16.mxu0 0
        %2197 = vmatpush2.bf16.msra.mxu0 0
        %2198 = vmatprep.subr.bf16.mxu0 0
        %2199 = vmatpush2.bf16.msra.mxu0 0
        %2200 = vmatprep.mubr.bf16.mxu0 0
        %2201 = vmatmul.mubr.bf16.gmra.mxu0 %v2166
        %v2202 = vpop.f32.mrf.mxu0
        %v2203 = vadd.f32 %v2138, %v2202
        %v2204 = vpop.f32.mrf.mxu0
        %v2205 = vpop.f32.mrf.mxu0
        %v2206 = vpop.f32.mrf.mxu0
        %2207 = vdwg.mxu0
        %v2208 = vadd.f32 %v2022, %v2203
        %2209 = vst.msk [vmem:[%s698] sm:$0xff] %vm707, %v2208
        %s2210 = sand.u32 %s435, 1
        %s2211 = scalar_lea.sflag [#allocation4], %s2210
        %s2212 = sand.u32 %s435, 1
        %s2213 = smul.addr %s2212, 8
        %s2214 = scalar_lea.vmem [#allocation16], %s2213
        // Predicated region
        $region125: #{tpu_custom_call.1} parent=91 // pred_check
          %p2215 = pneg %p445
        $region126: #{tpu_custom_call.1} parent=91 // pred_check_branch
          %2217 = sbr.rel (%p2215) target = $region128
        $region127: #{tpu_custom_call.1} parent=91 // pred_region
          %s2219 = ssub.s32 128, 128
          %2220 = vsyncadd %s2211, %s2219
          %s2221 = smul.addr %s39, 128
          %s2222 = scalar_lea.hbm %s18, %s2221
          %s2224 = sshll.u32 %s2214, 4
          %s2225 = int_to_ptr.vmem [resolvable:$true] %s2224
          %2227 = dma.vmem_to_hbm [thread:$0]  %s2225, 128, %s2222, %s2211
        $region128: #{tpu_custom_call.1} parent=91 // pred_fallthru
          _
      $region92: #{tpu_custom_call.1} parent=5 // pred_fallthru
        _
      %p2228 = scmp.le.s32.totalorder 2, %s34
      // Predicated region
      $region129: #{tpu_custom_call.1} parent=5 // pred_check
        %p2229 = pneg %p2228
      $region130: #{tpu_custom_call.1} parent=5 // pred_check_branch
        %2231 = sbr.rel (%p2229) target = $region132
      $region131: #{tpu_custom_call.1} parent=5 // pred_region
        %s2232 = ssub.s32 %s34, 2
        // Predicated region
        $region133: #{tpu_custom_call.1} parent=131 // pred_check
          %p2233 = pneg %p451
        $region134: #{tpu_custom_call.1} parent=131 // pred_check_branch
          %2235 = sbr.rel (%p2233) target = $region136
        $region135: #{tpu_custom_call.1} parent=131 // pred_region
          %s2236 = sand.u32 %s436, 1
          %s2237 = scalar_lea.sflag [#allocation4], %s2236
          %s2238 = sand.u32 %s436, 1
          %s2239 = smul.addr %s2238, 8
          %s2240 = scalar_lea.vmem [#allocation16], %s2239
          %2241 = dma.done %s2237, 128
        $region136: #{tpu_custom_call.1} parent=131 // pred_fallthru
          _
      $region132: #{tpu_custom_call.1} parent=5 // pred_fallthru
        _
    $region6: #{tpu_custom_call.1} parent=1 // loop_footer
      %s38 = sadd.s32 1, %s34
    $region7: #{tpu_custom_call.1} parent=1 // loop_footer_branch
      %33 = sbr.rel target = $region3
    $region8: #{tpu_custom_call.1} parent=1 // loop_exit
      _
    %2242 = vsyncpa [#allocation3], 1
    %s2243 = scalar_lea.sflag [#allocation3], 1
    %2244 = vsyncpa %s2243, 1
    %2245 = vsyncpa [#allocation6], 1
    %2246 = vsyncpa [#allocation9], 1
    %2247 = vsyncpa [#allocation12], 1
    %2248 = vsyncpa [#allocation15], 1
    %2249 = vsyncpa [#allocation4], 1
    %s2250 = scalar_lea.sflag [#allocation4], 1
    %2251 = vsyncpa %s2250, 1

</llo_original>
